<compile_context>
chip_gen: v7x
topology: tpu7x:2x2x1
jax: 0.10.0
libtpu: 0.0.40
codegen_flags: <defaults>
</compile_context>

<pallas_src>
import numpy as np
import jax
import jax.numpy as jnp
from jax.experimental import pallas as pl
from jax.experimental.pallas import tpu as pltpu

_CPAD = 8  # sublane-aligned padding for the 3-channel input / output


def _make_kernel(H, W, NHW):
    def kernel(x_ref, m_ref, w0_ref, b0_ref, w1_ref, b1_ref, w2_ref, b2_ref,
               o_ref):
        masks = m_ref[...]  # (8, NHW) f32 boundary masks, shared by all layers

        def conv3x3_relu(a, w_ref, b_ref):
            # a: (Cin, NHW) f32  ->  (Cout, NHW) f32, single stacked MXU matmul.
            taps = []
            mi = 0
            for ky in range(3):
                for kx in range(3):
                    dy, dx = ky - 1, kx - 1
                    d = dy * W + dx
                    if d == 0:
                        taps.append(a)
                    else:
                        # tap[p] = a[p + d]; the mask zeroes the 'same' padding
                        # and kills wrap-around / cross-image leakage.
                        tap = pltpu.roll(a, (-d) % NHW, axis=1)
                        taps.append(tap * masks[mi:mi + 1])
                        mi += 1
            stacked = jnp.concatenate(taps, axis=0)          # (9*Cin, NHW)
            out = jnp.dot(w_ref[...], stacked,
                          preferred_element_type=jnp.float32)
            return jnp.maximum(out + b_ref[...], 0.0)

        a0 = x_ref[...]                           # (8, NHW)  padded input
        a1 = conv3x3_relu(a0, w0_ref, b0_ref)     # (16, NHW)
        a2 = conv3x3_relu(a1, w1_ref, b1_ref)     # (16, NHW)
        a3 = conv3x3_relu(a2, w2_ref, b2_ref)     # (8, NHW)  padded output
        o_ref[...] = a3.astype(o_ref.dtype)

    return kernel


def _prep_w(w, cin_pad, cout_pad):
    # HWIO (3,3,cin,cout) -> stacked (cout_pad, 9*cin_pad); tap t = ky*3 + kx.
    kh, kw, cin, cout = w.shape
    w = jnp.transpose(w, (0, 1, 3, 2)).reshape(kh * kw, cout, cin)
    w = jnp.pad(w, ((0, 0), (0, cout_pad - cout), (0, cin_pad - cin)))
    w = jnp.transpose(w, (1, 0, 2)).reshape(cout_pad, kh * kw * cin_pad)
    return w.astype(jnp.float32)


def _prep_b(b, cout_pad):
    return jnp.pad(b, (0, cout_pad - b.shape[0])).reshape(-1, 1).astype(jnp.float32)


def prepare_params(params):
    """One-time weight/bias flattening. Call OUTSIDE the jitted forward."""
    (w0, b0), (w1, b1), (w2, b2) = params
    return (_prep_w(w0, _CPAD, 16), _prep_b(b0, 16),
            _prep_w(w1, 16, 16),    _prep_b(b1, 16),
            _prep_w(w2, 16, _CPAD), _prep_b(b2, _CPAD))


def _boundary_masks(N, H, W):
    # (8, N*H*W) f32; row order matches the kernel's off-center tap loop.
    q = np.arange(N * H * W) % (H * W)
    xs, ys = q % W, q // W
    rows = []
    for dy in (-1, 0, 1):
        for dx in (-1, 0, 1):
            if dy == 0 and dx == 0:
                continue
            rows.append((xs >= -dx) & (xs < W - dx) & (ys >= -dy) & (ys < H - dy))
    return np.stack(rows).astype(np.float32)


def model_forward(x_nchw, prepped):
    """Matches Model.forward (three 3x3-'same' conv + ReLU). Input NCHW."""
    w0s, b0p, w1s, b1p, w2s, b2p = prepped
    N, C, H, W = x_nchw.shape
    HW, NHW = H * W, N * H * W
    cout = 3

    # NCHW -> channel-major (C, N*HW) with the batch folded into lanes; pad 3->8.
    x = jnp.transpose(x_nchw.reshape(N, C, HW), (1, 0, 2)).reshape(C, NHW)
    x = jnp.pad(x.astype(jnp.float32), ((0, _CPAD - C), (0, 0)))
    masks = jnp.asarray(_boundary_masks(N, H, W))  # trace-time constant

    flops = 2 * 9 * NHW * (3 * 16 + 16 * 16 + 16 * 3)
    bytes_accessed = 4 * (x.size + masks.size + w0s.size + b0p.size +
                          w1s.size + b1p.size + w2s.size + b2p.size +
                          _CPAD * NHW)

    out = pl.pallas_call(
        _make_kernel(H, W, NHW),
        out_shape=jax.ShapeDtypeStruct((_CPAD, NHW), jnp.float32),
        grid_spec=pltpu.PrefetchScalarGridSpec(
            num_scalar_prefetch=0,
            grid=(1,),
            in_specs=[
                pl.BlockSpec(x.shape, lambda i: (0, 0)),
                pl.BlockSpec(masks.shape, lambda i: (0, 0)),
                pl.BlockSpec(w0s.shape, lambda i: (0, 0)),
                pl.BlockSpec(b0p.shape, lambda i: (0, 0)),
                pl.BlockSpec(w1s.shape, lambda i: (0, 0)),
                pl.BlockSpec(b1p.shape, lambda i: (0, 0)),
                pl.BlockSpec(w2s.shape, lambda i: (0, 0)),
                pl.BlockSpec(b2p.shape, lambda i: (0, 0)),
            ],
            out_specs=pl.BlockSpec((_CPAD, NHW), lambda i: (0, 0)),
        ),
        compiler_params=pltpu.CompilerParams(
            dimension_semantics=("arbitrary",)),
        cost_estimate=pl.CostEstimate(flops=flops, transcendentals=0,
                                      bytes_accessed=bytes_accessed),
    )(x, masks, w0s, b0p, w1s, b1p, w2s, b2p)

    # (8, N*HW) -> NCHW, drop the padded output channels.
    out = jnp.transpose(out.reshape(_CPAD, N, HW), (1, 0, 2))[:, :cout]
    return out.reshape(N, cout, H, W)


def _init_conv(kw, kb, cin, cout):
    # PyTorch Conv2d default init: U(-1/sqrt(fan_in), 1/sqrt(fan_in)), fan_in = cin*3*3.
    bound = 1.0 / (cin * 3 * 3) ** 0.5
    w = jax.random.uniform(kw, (3, 3, cin, cout), jnp.float32, -bound, bound)  # HWIO
    b = jax.random.uniform(kb, (cout,), jnp.float32, -bound, bound)
    return w, b


if __name__ == "__main__":
    key = jax.random.PRNGKey(0)
    ks = jax.random.split(key, 7)

    # Shapes consistent with the module: batch=2, 3 input channels, 16x16 spatial.
    x_nchw = jax.random.normal(ks[0], (2, 3, 16, 16), jnp.float32)
    params = (
        _init_conv(ks[1], ks[2], 3, 16),
        _init_conv(ks[3], ks[4], 16, 16),
        _init_conv(ks[5], ks[6], 16, 3),
    )

    prepped = prepare_params(params)           # once, outside jit
    fwd = jax.jit(model_forward)
    y = jax.block_until_ready(fwd(x_nchw, prepped))

    # Reference: XLA conv (NCHW / HWIO, cross-correlation like PyTorch Conv2d).
    def ref_layer(x, w, b):
        out = jax.lax.conv_general_dilated(
            x, w, window_strides=(1, 1), padding="SAME",
            dimension_numbers=("NCHW", "HWIO", "NCHW"))
        return jnp.maximum(out + b.reshape(1, -1, 1, 1), 0.0)

    xr = x_nchw
    for (w, b) in params:
        xr = ref_layer(xr, w, b)

    assert y.shape == (2, 3, 16, 16)
    assert jnp.allclose(y, xr, atol=1e-4, rtol=1e-4), float(jnp.max(jnp.abs(y - xr)))

    print("KERNEL_OK")
</pallas_src>

<mosaic_0001>
module attributes {stable_mosaic.version = 11 : i64} {
  func.func @kernel(%arg0: i32, %arg1: memref<8x512xf32, #tpu.memory_space<vmem>>, %arg2: memref<8x512xf32, #tpu.memory_space<vmem>>, %arg3: memref<16x72xf32, #tpu.memory_space<vmem>>, %arg4: memref<16x1xf32, #tpu.memory_space<vmem>>, %arg5: memref<16x144xf32, #tpu.memory_space<vmem>>, %arg6: memref<16x1xf32, #tpu.memory_space<vmem>>, %arg7: memref<8x144xf32, #tpu.memory_space<vmem>>, %arg8: memref<8x1xf32, #tpu.memory_space<vmem>>, %arg9: memref<8x512xf32, #tpu.memory_space<vmem>>) attributes {dimension_semantics = [#tpu.dimension_semantics<arbitrary>], iteration_bounds = array<i64: 1>, scalar_prefetch = 0 : i64, scratch_operands = 0 : i64, tpu.core_type = #tpu.core_type<tc>, window_params = [{pipeline_mode = #tpu.pipeline_mode<synchronous>, transform_indices = @transform_0, window_bounds = array<i64: 8, 512>}, {pipeline_mode = #tpu.pipeline_mode<synchronous>, transform_indices = @transform_1, window_bounds = array<i64: 8, 512>}, {pipeline_mode = #tpu.pipeline_mode<synchronous>, transform_indices = @transform_2, window_bounds = array<i64: 16, 72>}, {pipeline_mode = #tpu.pipeline_mode<synchronous>, transform_indices = @transform_3, window_bounds = array<i64: 16, 1>}, {pipeline_mode = #tpu.pipeline_mode<synchronous>, transform_indices = @transform_4, window_bounds = array<i64: 16, 144>}, {pipeline_mode = #tpu.pipeline_mode<synchronous>, transform_indices = @transform_5, window_bounds = array<i64: 16, 1>}, {pipeline_mode = #tpu.pipeline_mode<synchronous>, transform_indices = @transform_6, window_bounds = array<i64: 8, 144>}, {pipeline_mode = #tpu.pipeline_mode<synchronous>, transform_indices = @transform_7, window_bounds = array<i64: 8, 1>}, {pipeline_mode = #tpu.pipeline_mode<synchronous>, transform_indices = @transform_8, window_bounds = array<i64: 8, 512>}]} {
    %c0 = arith.constant 0 : index
    %c0_0 = arith.constant 0 : index
    %0 = vector.load %arg2[%c0, %c0_0] : memref<8x512xf32, #tpu.memory_space<vmem>>, vector<8x512xf32>
    %c0_1 = arith.constant 0 : index
    %c0_2 = arith.constant 0 : index
    %1 = vector.load %arg1[%c0_1, %c0_2] : memref<8x512xf32, #tpu.memory_space<vmem>>, vector<8x512xf32>
    %c17_i32 = arith.constant 17 : i32
    %2 = tpu.dynamic_rotate %1 by %c17_i32 dim 1 : vector<8x512xf32>, i32 -> vector<8x512xf32>
    %3 = vector.extract_strided_slice %0 {offsets = [0, 0], sizes = [1, 512], strides = [1, 1]} : vector<8x512xf32> to vector<1x512xf32>
    %4 = vector.broadcast %3 : vector<1x512xf32> to vector<8x512xf32>
    %5 = arith.mulf %2, %4 : vector<8x512xf32>
    %c16_i32 = arith.constant 16 : i32
    %6 = tpu.dynamic_rotate %1 by %c16_i32 dim 1 : vector<8x512xf32>, i32 -> vector<8x512xf32>
    %7 = vector.extract_strided_slice %0 {offsets = [1, 0], sizes = [1, 512], strides = [1, 1]} : vector<8x512xf32> to vector<1x512xf32>
    %8 = vector.broadcast %7 : vector<1x512xf32> to vector<8x512xf32>
    %9 = arith.mulf %6, %8 : vector<8x512xf32>
    %c15_i32 = arith.constant 15 : i32
    %10 = tpu.dynamic_rotate %1 by %c15_i32 dim 1 : vector<8x512xf32>, i32 -> vector<8x512xf32>
    %11 = vector.extract_strided_slice %0 {offsets = [2, 0], sizes = [1, 512], strides = [1, 1]} : vector<8x512xf32> to vector<1x512xf32>
    %12 = vector.broadcast %11 : vector<1x512xf32> to vector<8x512xf32>
    %13 = arith.mulf %10, %12 : vector<8x512xf32>
    %c1_i32 = arith.constant 1 : i32
    %14 = tpu.dynamic_rotate %1 by %c1_i32 dim 1 : vector<8x512xf32>, i32 -> vector<8x512xf32>
    %15 = vector.extract_strided_slice %0 {offsets = [3, 0], sizes = [1, 512], strides = [1, 1]} : vector<8x512xf32> to vector<1x512xf32>
    %16 = vector.broadcast %15 : vector<1x512xf32> to vector<8x512xf32>
    %17 = arith.mulf %14, %16 : vector<8x512xf32>
    %c511_i32 = arith.constant 511 : i32
    %18 = tpu.dynamic_rotate %1 by %c511_i32 dim 1 : vector<8x512xf32>, i32 -> vector<8x512xf32>
    %19 = vector.extract_strided_slice %0 {offsets = [4, 0], sizes = [1, 512], strides = [1, 1]} : vector<8x512xf32> to vector<1x512xf32>
    %20 = vector.broadcast %19 : vector<1x512xf32> to vector<8x512xf32>
    %21 = arith.mulf %18, %20 : vector<8x512xf32>
    %c497_i32 = arith.constant 497 : i32
    %22 = tpu.dynamic_rotate %1 by %c497_i32 dim 1 : vector<8x512xf32>, i32 -> vector<8x512xf32>
    %23 = vector.extract_strided_slice %0 {offsets = [5, 0], sizes = [1, 512], strides = [1, 1]} : vector<8x512xf32> to vector<1x512xf32>
    %24 = vector.broadcast %23 : vector<1x512xf32> to vector<8x512xf32>
    %25 = arith.mulf %22, %24 : vector<8x512xf32>
    %c496_i32 = arith.constant 496 : i32
    %26 = tpu.dynamic_rotate %1 by %c496_i32 dim 1 : vector<8x512xf32>, i32 -> vector<8x512xf32>
    %27 = vector.extract_strided_slice %0 {offsets = [6, 0], sizes = [1, 512], strides = [1, 1]} : vector<8x512xf32> to vector<1x512xf32>
    %28 = vector.broadcast %27 : vector<1x512xf32> to vector<8x512xf32>
    %29 = arith.mulf %26, %28 : vector<8x512xf32>
    %c495_i32 = arith.constant 495 : i32
    %30 = tpu.dynamic_rotate %1 by %c495_i32 dim 1 : vector<8x512xf32>, i32 -> vector<8x512xf32>
    %31 = vector.extract_strided_slice %0 {offsets = [7, 0], sizes = [1, 512], strides = [1, 1]} : vector<8x512xf32> to vector<1x512xf32>
    %32 = vector.broadcast %31 : vector<1x512xf32> to vector<8x512xf32>
    %33 = arith.mulf %30, %32 : vector<8x512xf32>
    %34 = tpu.concatenate %5, %9, %13, %17, %1, %21, %25, %29, %33 in 0 : vector<8x512xf32>, vector<8x512xf32>, vector<8x512xf32>, vector<8x512xf32>, vector<8x512xf32>, vector<8x512xf32>, vector<8x512xf32>, vector<8x512xf32>, vector<8x512xf32> -> vector<72x512xf32>
    %c0_3 = arith.constant 0 : index
    %c0_4 = arith.constant 0 : index
    %35 = vector.load %arg3[%c0_3, %c0_4] : memref<16x72xf32, #tpu.memory_space<vmem>>, vector<16x72xf32>
    %cst = arith.constant dense<0.000000e+00> : vector<16x512xf32>
    %36 = tpu.matmul %35, %34, %cst {dimension_numbers = #tpu.dot_dimension_numbers<[1], [0], [0], [1], [0, 0, 1, 1], [], []>} : vector<16x72xf32>, vector<72x512xf32>, vector<16x512xf32> -> vector<16x512xf32>
    %c0_5 = arith.constant 0 : index
    %c0_6 = arith.constant 0 : index
    %37 = vector.load %arg4[%c0_5, %c0_6] : memref<16x1xf32, #tpu.memory_space<vmem>>, vector<16x1xf32>
    %38 = vector.broadcast %37 : vector<16x1xf32> to vector<16x512xf32>
    %39 = arith.addf %36, %38 : vector<16x512xf32>
    %cst_7 = arith.constant 0.000000e+00 : f32
    %40 = vector.broadcast %cst_7 : f32 to vector<16x512xf32>
    %41 = arith.maximumf %39, %40 : vector<16x512xf32>
    %c17_i32_8 = arith.constant 17 : i32
    %42 = tpu.dynamic_rotate %41 by %c17_i32_8 dim 1 : vector<16x512xf32>, i32 -> vector<16x512xf32>
    %43 = vector.extract_strided_slice %0 {offsets = [0, 0], sizes = [1, 512], strides = [1, 1]} : vector<8x512xf32> to vector<1x512xf32>
    %44 = vector.broadcast %43 : vector<1x512xf32> to vector<16x512xf32>
    %45 = arith.mulf %42, %44 : vector<16x512xf32>
    %c16_i32_9 = arith.constant 16 : i32
    %46 = tpu.dynamic_rotate %41 by %c16_i32_9 dim 1 : vector<16x512xf32>, i32 -> vector<16x512xf32>
    %47 = vector.extract_strided_slice %0 {offsets = [1, 0], sizes = [1, 512], strides = [1, 1]} : vector<8x512xf32> to vector<1x512xf32>
    %48 = vector.broadcast %47 : vector<1x512xf32> to vector<16x512xf32>
    %49 = arith.mulf %46, %48 : vector<16x512xf32>
    %c15_i32_10 = arith.constant 15 : i32
    %50 = tpu.dynamic_rotate %41 by %c15_i32_10 dim 1 : vector<16x512xf32>, i32 -> vector<16x512xf32>
    %51 = vector.extract_strided_slice %0 {offsets = [2, 0], sizes = [1, 512], strides = [1, 1]} : vector<8x512xf32> to vector<1x512xf32>
    %52 = vector.broadcast %51 : vector<1x512xf32> to vector<16x512xf32>
    %53 = arith.mulf %50, %52 : vector<16x512xf32>
    %c1_i32_11 = arith.constant 1 : i32
    %54 = tpu.dynamic_rotate %41 by %c1_i32_11 dim 1 : vector<16x512xf32>, i32 -> vector<16x512xf32>
    %55 = vector.extract_strided_slice %0 {offsets = [3, 0], sizes = [1, 512], strides = [1, 1]} : vector<8x512xf32> to vector<1x512xf32>
    %56 = vector.broadcast %55 : vector<1x512xf32> to vector<16x512xf32>
    %57 = arith.mulf %54, %56 : vector<16x512xf32>
    %c511_i32_12 = arith.constant 511 : i32
    %58 = tpu.dynamic_rotate %41 by %c511_i32_12 dim 1 : vector<16x512xf32>, i32 -> vector<16x512xf32>
    %59 = vector.extract_strided_slice %0 {offsets = [4, 0], sizes = [1, 512], strides = [1, 1]} : vector<8x512xf32> to vector<1x512xf32>
    %60 = vector.broadcast %59 : vector<1x512xf32> to vector<16x512xf32>
    %61 = arith.mulf %58, %60 : vector<16x512xf32>
    %c497_i32_13 = arith.constant 497 : i32
    %62 = tpu.dynamic_rotate %41 by %c497_i32_13 dim 1 : vector<16x512xf32>, i32 -> vector<16x512xf32>
    %63 = vector.extract_strided_slice %0 {offsets = [5, 0], sizes = [1, 512], strides = [1, 1]} : vector<8x512xf32> to vector<1x512xf32>
    %64 = vector.broadcast %63 : vector<1x512xf32> to vector<16x512xf32>
    %65 = arith.mulf %62, %64 : vector<16x512xf32>
    %c496_i32_14 = arith.constant 496 : i32
    %66 = tpu.dynamic_rotate %41 by %c496_i32_14 dim 1 : vector<16x512xf32>, i32 -> vector<16x512xf32>
    %67 = vector.extract_strided_slice %0 {offsets = [6, 0], sizes = [1, 512], strides = [1, 1]} : vector<8x512xf32> to vector<1x512xf32>
    %68 = vector.broadcast %67 : vector<1x512xf32> to vector<16x512xf32>
    %69 = arith.mulf %66, %68 : vector<16x512xf32>
    %c495_i32_15 = arith.constant 495 : i32
    %70 = tpu.dynamic_rotate %41 by %c495_i32_15 dim 1 : vector<16x512xf32>, i32 -> vector<16x512xf32>
    %71 = vector.extract_strided_slice %0 {offsets = [7, 0], sizes = [1, 512], strides = [1, 1]} : vector<8x512xf32> to vector<1x512xf32>
    %72 = vector.broadcast %71 : vector<1x512xf32> to vector<16x512xf32>
    %73 = arith.mulf %70, %72 : vector<16x512xf32>
    %74 = tpu.concatenate %45, %49, %53, %57, %41, %61, %65, %69, %73 in 0 : vector<16x512xf32>, vector<16x512xf32>, vector<16x512xf32>, vector<16x512xf32>, vector<16x512xf32>, vector<16x512xf32>, vector<16x512xf32>, vector<16x512xf32>, vector<16x512xf32> -> vector<144x512xf32>
    %c0_16 = arith.constant 0 : index
    %c0_17 = arith.constant 0 : index
    %75 = vector.load %arg5[%c0_16, %c0_17] : memref<16x144xf32, #tpu.memory_space<vmem>>, vector<16x144xf32>
    %cst_18 = arith.constant dense<0.000000e+00> : vector<16x512xf32>
    %76 = tpu.matmul %75, %74, %cst_18 {dimension_numbers = #tpu.dot_dimension_numbers<[1], [0], [0], [1], [0, 0, 1, 1], [], []>} : vector<16x144xf32>, vector<144x512xf32>, vector<16x512xf32> -> vector<16x512xf32>
    %c0_19 = arith.constant 0 : index
    %c0_20 = arith.constant 0 : index
    %77 = vector.load %arg6[%c0_19, %c0_20] : memref<16x1xf32, #tpu.memory_space<vmem>>, vector<16x1xf32>
    %78 = vector.broadcast %77 : vector<16x1xf32> to vector<16x512xf32>
    %79 = arith.addf %76, %78 : vector<16x512xf32>
    %cst_21 = arith.constant 0.000000e+00 : f32
    %80 = vector.broadcast %cst_21 : f32 to vector<16x512xf32>
    %81 = arith.maximumf %79, %80 : vector<16x512xf32>
    %c17_i32_22 = arith.constant 17 : i32
    %82 = tpu.dynamic_rotate %81 by %c17_i32_22 dim 1 : vector<16x512xf32>, i32 -> vector<16x512xf32>
    %83 = vector.extract_strided_slice %0 {offsets = [0, 0], sizes = [1, 512], strides = [1, 1]} : vector<8x512xf32> to vector<1x512xf32>
    %84 = vector.broadcast %83 : vector<1x512xf32> to vector<16x512xf32>
    %85 = arith.mulf %82, %84 : vector<16x512xf32>
    %c16_i32_23 = arith.constant 16 : i32
    %86 = tpu.dynamic_rotate %81 by %c16_i32_23 dim 1 : vector<16x512xf32>, i32 -> vector<16x512xf32>
    %87 = vector.extract_strided_slice %0 {offsets = [1, 0], sizes = [1, 512], strides = [1, 1]} : vector<8x512xf32> to vector<1x512xf32>
    %88 = vector.broadcast %87 : vector<1x512xf32> to vector<16x512xf32>
    %89 = arith.mulf %86, %88 : vector<16x512xf32>
    %c15_i32_24 = arith.constant 15 : i32
    %90 = tpu.dynamic_rotate %81 by %c15_i32_24 dim 1 : vector<16x512xf32>, i32 -> vector<16x512xf32>
    %91 = vector.extract_strided_slice %0 {offsets = [2, 0], sizes = [1, 512], strides = [1, 1]} : vector<8x512xf32> to vector<1x512xf32>
    %92 = vector.broadcast %91 : vector<1x512xf32> to vector<16x512xf32>
    %93 = arith.mulf %90, %92 : vector<16x512xf32>
    %c1_i32_25 = arith.constant 1 : i32
    %94 = tpu.dynamic_rotate %81 by %c1_i32_25 dim 1 : vector<16x512xf32>, i32 -> vector<16x512xf32>
    %95 = vector.extract_strided_slice %0 {offsets = [3, 0], sizes = [1, 512], strides = [1, 1]} : vector<8x512xf32> to vector<1x512xf32>
    %96 = vector.broadcast %95 : vector<1x512xf32> to vector<16x512xf32>
    %97 = arith.mulf %94, %96 : vector<16x512xf32>
    %c511_i32_26 = arith.constant 511 : i32
    %98 = tpu.dynamic_rotate %81 by %c511_i32_26 dim 1 : vector<16x512xf32>, i32 -> vector<16x512xf32>
    %99 = vector.extract_strided_slice %0 {offsets = [4, 0], sizes = [1, 512], strides = [1, 1]} : vector<8x512xf32> to vector<1x512xf32>
    %100 = vector.broadcast %99 : vector<1x512xf32> to vector<16x512xf32>
    %101 = arith.mulf %98, %100 : vector<16x512xf32>
    %c497_i32_27 = arith.constant 497 : i32
    %102 = tpu.dynamic_rotate %81 by %c497_i32_27 dim 1 : vector<16x512xf32>, i32 -> vector<16x512xf32>
    %103 = vector.extract_strided_slice %0 {offsets = [5, 0], sizes = [1, 512], strides = [1, 1]} : vector<8x512xf32> to vector<1x512xf32>
    %104 = vector.broadcast %103 : vector<1x512xf32> to vector<16x512xf32>
    %105 = arith.mulf %102, %104 : vector<16x512xf32>
    %c496_i32_28 = arith.constant 496 : i32
    %106 = tpu.dynamic_rotate %81 by %c496_i32_28 dim 1 : vector<16x512xf32>, i32 -> vector<16x512xf32>
    %107 = vector.extract_strided_slice %0 {offsets = [6, 0], sizes = [1, 512], strides = [1, 1]} : vector<8x512xf32> to vector<1x512xf32>
    %108 = vector.broadcast %107 : vector<1x512xf32> to vector<16x512xf32>
    %109 = arith.mulf %106, %108 : vector<16x512xf32>
    %c495_i32_29 = arith.constant 495 : i32
    %110 = tpu.dynamic_rotate %81 by %c495_i32_29 dim 1 : vector<16x512xf32>, i32 -> vector<16x512xf32>
    %111 = vector.extract_strided_slice %0 {offsets = [7, 0], sizes = [1, 512], strides = [1, 1]} : vector<8x512xf32> to vector<1x512xf32>
    %112 = vector.broadcast %111 : vector<1x512xf32> to vector<16x512xf32>
    %113 = arith.mulf %110, %112 : vector<16x512xf32>
    %114 = tpu.concatenate %85, %89, %93, %97, %81, %101, %105, %109, %113 in 0 : vector<16x512xf32>, vector<16x512xf32>, vector<16x512xf32>, vector<16x512xf32>, vector<16x512xf32>, vector<16x512xf32>, vector<16x512xf32>, vector<16x512xf32>, vector<16x512xf32> -> vector<144x512xf32>
    %c0_30 = arith.constant 0 : index
    %c0_31 = arith.constant 0 : index
    %115 = vector.load %arg7[%c0_30, %c0_31] : memref<8x144xf32, #tpu.memory_space<vmem>>, vector<8x144xf32>
    %cst_32 = arith.constant dense<0.000000e+00> : vector<8x512xf32>
    %116 = tpu.matmul %115, %114, %cst_32 {dimension_numbers = #tpu.dot_dimension_numbers<[1], [0], [0], [1], [0, 0, 1, 1], [], []>} : vector<8x144xf32>, vector<144x512xf32>, vector<8x512xf32> -> vector<8x512xf32>
    %c0_33 = arith.constant 0 : index
    %c0_34 = arith.constant 0 : index
    %117 = vector.load %arg8[%c0_33, %c0_34] : memref<8x1xf32, #tpu.memory_space<vmem>>, vector<8x1xf32>
    %118 = vector.broadcast %117 : vector<8x1xf32> to vector<8x512xf32>
    %119 = arith.addf %116, %118 : vector<8x512xf32>
    %cst_35 = arith.constant 0.000000e+00 : f32
    %120 = vector.broadcast %cst_35 : f32 to vector<8x512xf32>
    %121 = arith.maximumf %119, %120 : vector<8x512xf32>
    %c0_36 = arith.constant 0 : index
    %c0_37 = arith.constant 0 : index
    %122 = vector.load %arg9[%c0_36, %c0_37] : memref<8x512xf32, #tpu.memory_space<vmem>>, vector<8x512xf32>
    tpu.vector_store %arg9[%c0_36, %c0_37], %121 {strides = array<i32>} : memref<8x512xf32, #tpu.memory_space<vmem>>, vector<8x512xf32>,
    return
  }
  func.func @transform_0(%arg0: i32) -> (i32, i32) {
    %c0_i32 = arith.constant 0 : i32
    %c0_i32_0 = arith.constant 0 : i32
    %c0_i32_1 = arith.constant 0 : i32
    return %c0_i32, %c0_i32_0 : i32, i32
  }
  func.func @transform_1(%arg0: i32) -> (i32, i32) {
    %c0_i32 = arith.constant 0 : i32
    %c0_i32_0 = arith.constant 0 : i32
    %c0_i32_1 = arith.constant 0 : i32
    return %c0_i32, %c0_i32_0 : i32, i32
  }
  func.func @transform_2(%arg0: i32) -> (i32, i32) {
    %c0_i32 = arith.constant 0 : i32
    %c0_i32_0 = arith.constant 0 : i32
    %c0_i32_1 = arith.constant 0 : i32
    return %c0_i32, %c0_i32_0 : i32, i32
  }
  func.func @transform_3(%arg0: i32) -> (i32, i32) {
    %c0_i32 = arith.constant 0 : i32
    %c0_i32_0 = arith.constant 0 : i32
    %c0_i32_1 = arith.constant 0 : i32
    return %c0_i32, %c0_i32_0 : i32, i32
  }
  func.func @transform_4(%arg0: i32) -> (i32, i32) {
    %c0_i32 = arith.constant 0 : i32
    %c0_i32_0 = arith.constant 0 : i32
    %c0_i32_1 = arith.constant 0 : i32
    return %c0_i32, %c0_i32_0 : i32, i32
  }
  func.func @transform_5(%arg0: i32) -> (i32, i32) {
    %c0_i32 = arith.constant 0 : i32
    %c0_i32_0 = arith.constant 0 : i32
    %c0_i32_1 = arith.constant 0 : i32
    return %c0_i32, %c0_i32_0 : i32, i32
  }
  func.func @transform_6(%arg0: i32) -> (i32, i32) {
    %c0_i32 = arith.constant 0 : i32
    %c0_i32_0 = arith.constant 0 : i32
    %c0_i32_1 = arith.constant 0 : i32
    return %c0_i32, %c0_i32_0 : i32, i32
  }
  func.func @transform_7(%arg0: i32) -> (i32, i32) {
    %c0_i32 = arith.constant 0 : i32
    %c0_i32_0 = arith.constant 0 : i32
    %c0_i32_1 = arith.constant 0 : i32
    return %c0_i32, %c0_i32_0 : i32, i32
  }
  func.func @transform_8(%arg0: i32) -> (i32, i32) {
    %c0_i32 = arith.constant 0 : i32
    %c0_i32_0 = arith.constant 0 : i32
    %c0_i32_1 = arith.constant 0 : i32
    return %c0_i32, %c0_i32_0 : i32, i32
  }
}

</mosaic_0001>

<llo_original>
// kernel: model_forward.1
$region0: #{model_forward.1}
  #allocation0 [shape = 'u32[]', space=smem, size = 0x4, offset = 0x4, fixed_abs, tag = 'smem constant byte address 0x4 - core index']
  #allocation1 [shape = 'u32[144,128]{1,0:T(1,128)}', space=vmem, size = 0x12000, scoped, tag = 'internal scratch']
  %s0 = inlined_call_operand.vmem [shape: f32[8,512], index: 0, kind: input, shape index: {}]
  %s1 = inlined_call_operand.vmem [shape: f32[8,512], index: 1, kind: input, shape index: {}]
  %s2 = inlined_call_operand.vmem [shape: f32[16,72], index: 2, kind: input, shape index: {}]
  %s3 = inlined_call_operand.vmem [shape: f32[16,1], index: 3, kind: input, shape index: {}]
  %s4 = inlined_call_operand.vmem [shape: f32[16,144], index: 4, kind: input, shape index: {}]
  %s5 = inlined_call_operand.vmem [shape: f32[16,1], index: 5, kind: input, shape index: {}]
  %s6 = inlined_call_operand.vmem [shape: f32[8,144], index: 6, kind: input, shape index: {}]
  %s7 = inlined_call_operand.vmem [shape: f32[8,1], index: 7, kind: input, shape index: {}]
  %s8 = inlined_call_operand.vmem [shape: f32[8,512], index: 8, kind: output, shape index: {}]
  %s9 = sld [smem:[#allocation0]]
  $region42: #{model_forward.1} parent=0
    _
  %s11 = ssub.s32 1, %s9
  %s12 = scalar_select 0, %s11, %s9
  // Predicated region
  $region2: #{model_forward.1} parent=0 // pred_check
    _
  $region3: #{model_forward.1} parent=0 // pred_check_branch
    %14 = sbr.rel (0) target = $region5
  $region4: #{model_forward.1} parent=0 // pred_region
    _
  $region5: #{model_forward.1} parent=0 // pred_fallthru
    _
  // Predicated region
  $region6: #{model_forward.1} parent=0 // pred_check
    _
  $region7: #{model_forward.1} parent=0 // pred_check_branch
    %16 = sbr.rel (0) target = $region9
  $region8: #{model_forward.1} parent=0 // pred_region
    _
  $region9: #{model_forward.1} parent=0 // pred_fallthru
    _
  // Predicated region
  $region10: #{model_forward.1} parent=0 // pred_check
    _
  $region11: #{model_forward.1} parent=0 // pred_check_branch
    %18 = sbr.rel (0) target = $region13
  $region12: #{model_forward.1} parent=0 // pred_region
    _
  $region13: #{model_forward.1} parent=0 // pred_fallthru
    _
  // Predicated region
  $region14: #{model_forward.1} parent=0 // pred_check
    _
  $region15: #{model_forward.1} parent=0 // pred_check_branch
    %20 = sbr.rel (0) target = $region17
  $region16: #{model_forward.1} parent=0 // pred_region
    _
  $region17: #{model_forward.1} parent=0 // pred_fallthru
    _
  // Predicated region
  $region18: #{model_forward.1} parent=0 // pred_check
    _
  $region19: #{model_forward.1} parent=0 // pred_check_branch
    %22 = sbr.rel (0) target = $region21
  $region20: #{model_forward.1} parent=0 // pred_region
    _
  $region21: #{model_forward.1} parent=0 // pred_fallthru
    _
  // Predicated region
  $region22: #{model_forward.1} parent=0 // pred_check
    _
  $region23: #{model_forward.1} parent=0 // pred_check_branch
    %24 = sbr.rel (0) target = $region25
  $region24: #{model_forward.1} parent=0 // pred_region
    _
  $region25: #{model_forward.1} parent=0 // pred_fallthru
    _
  // Predicated region
  $region26: #{model_forward.1} parent=0 // pred_check
    _
  $region27: #{model_forward.1} parent=0 // pred_check_branch
    %26 = sbr.rel (0) target = $region29
  $region28: #{model_forward.1} parent=0 // pred_region
    _
  $region29: #{model_forward.1} parent=0 // pred_fallthru
    _
  // Predicated region
  $region30: #{model_forward.1} parent=0 // pred_check
    _
  $region31: #{model_forward.1} parent=0 // pred_check_branch
    %28 = sbr.rel (0) target = $region33
  $region32: #{model_forward.1} parent=0 // pred_region
    _
  $region33: #{model_forward.1} parent=0 // pred_fallthru
    _
  %v29 = vld [vmem:[%s1] sm:$0xff]
  %v30 = vld [vmem:[%s1 + $0x8] sm:$0xff]
  %v31 = vld [vmem:[%s1 + $0x10] sm:$0xff]
  %v32 = vld [vmem:[%s1 + $0x18] sm:$0xff]
  %v33 = vld [vmem:[%s0] sm:$0xff]
  %v34 = vld [vmem:[%s0 + $0x8] sm:$0xff]
  %v35 = vld [vmem:[%s0 + $0x10] sm:$0xff]
  %v36 = vld [vmem:[%s0 + $0x18] sm:$0xff]
  %37 = vrot.lane.b32.xlu0 %v33, 17
  %v38 = vpop.permute.xlu0 %37
  %39 = vrot.lane.b32.xlu0 %v34, 17
  %v40 = vpop.permute.xlu0 %39
  %41 = vrot.lane.b32.xlu0 %v35, 17
  %v42 = vpop.permute.xlu0 %41
  %43 = vrot.lane.b32.xlu0 %v36, 17
  %v44 = vpop.permute.xlu0 %43
  %v45 = vlaneseq
  %v46 = vand.u32 %v45, 127
  %vm47 = vcmp.lt.s32.totalorder %v46, 17
  %v48 = vsel %vm47, %v42, %v44
  %v49 = vsel %vm47, %v40, %v42
  %v50 = vsel %vm47, %v38, %v40
  %v51 = vsel %vm47, %v44, %v38
  %v52 = vlaneseq
  %v53 = vshrl.u32 %v52, 7
  %v54 = vsub.s32 0, %v53
  %v55 = vrot.slane %v29, %v54
  %v56 = vlaneseq
  %v57 = vshrl.u32 %v56, 7
  %v58 = vsub.s32 0, %v57
  %v59 = vrot.slane %v30, %v58
  %v60 = vlaneseq
  %v61 = vshrl.u32 %v60, 7
  %v62 = vsub.s32 0, %v61
  %v63 = vrot.slane %v31, %v62
  %v64 = vlaneseq
  %v65 = vshrl.u32 %v64, 7
  %v66 = vsub.s32 0, %v65
  %v67 = vrot.slane %v32, %v66
  %v68 = vmul.f32 %v51, %v55
  %v69 = vmul.f32 %v50, %v59
  %v70 = vmul.f32 %v49, %v63
  %v71 = vmul.f32 %v48, %v67
  %72 = vrot.lane.b32.xlu0 %v33, 16
  %v73 = vpop.permute.xlu0 %72
  %74 = vrot.lane.b32.xlu0 %v34, 16
  %v75 = vpop.permute.xlu0 %74
  %76 = vrot.lane.b32.xlu0 %v35, 16
  %v77 = vpop.permute.xlu0 %76
  %78 = vrot.lane.b32.xlu0 %v36, 16
  %v79 = vpop.permute.xlu0 %78
  %vm80 = vcmp.lt.s32.totalorder %v46, 16
  %v81 = vsel %vm80, %v77, %v79
  %v82 = vsel %vm80, %v75, %v77
  %v83 = vsel %vm80, %v73, %v75
  %v84 = vsel %vm80, %v79, %v73
  %v85 = vlaneseq
  %v86 = vshrl.u32 %v85, 7
  %v87 = vsub.s32 1, %v86
  %v88 = vrot.slane %v29, %v87
  %v89 = vlaneseq
  %v90 = vshrl.u32 %v89, 7
  %v91 = vsub.s32 1, %v90
  %v92 = vrot.slane %v30, %v91
  %v93 = vlaneseq
  %v94 = vshrl.u32 %v93, 7
  %v95 = vsub.s32 1, %v94
  %v96 = vrot.slane %v31, %v95
  %v97 = vlaneseq
  %v98 = vshrl.u32 %v97, 7
  %v99 = vsub.s32 1, %v98
  %v100 = vrot.slane %v32, %v99
  %v101 = vmul.f32 %v84, %v88
  %v102 = vmul.f32 %v83, %v92
  %v103 = vmul.f32 %v82, %v96
  %v104 = vmul.f32 %v81, %v100
  %105 = vrot.lane.b32.xlu0 %v33, 15
  %v106 = vpop.permute.xlu0 %105
  %107 = vrot.lane.b32.xlu0 %v34, 15
  %v108 = vpop.permute.xlu0 %107
  %109 = vrot.lane.b32.xlu0 %v35, 15
  %v110 = vpop.permute.xlu0 %109
  %111 = vrot.lane.b32.xlu0 %v36, 15
  %v112 = vpop.permute.xlu0 %111
  %vm113 = vcmp.lt.s32.totalorder %v46, 15
  %v114 = vsel %vm113, %v110, %v112
  %v115 = vsel %vm113, %v108, %v110
  %v116 = vsel %vm113, %v106, %v108
  %v117 = vsel %vm113, %v112, %v106
  %v118 = vlaneseq
  %v119 = vshrl.u32 %v118, 7
  %v120 = vsub.s32 2, %v119
  %v121 = vrot.slane %v29, %v120
  %v122 = vlaneseq
  %v123 = vshrl.u32 %v122, 7
  %v124 = vsub.s32 2, %v123
  %v125 = vrot.slane %v30, %v124
  %v126 = vlaneseq
  %v127 = vshrl.u32 %v126, 7
  %v128 = vsub.s32 2, %v127
  %v129 = vrot.slane %v31, %v128
  %v130 = vlaneseq
  %v131 = vshrl.u32 %v130, 7
  %v132 = vsub.s32 2, %v131
  %v133 = vrot.slane %v32, %v132
  %v134 = vmul.f32 %v117, %v121
  %v135 = vmul.f32 %v116, %v125
  %v136 = vmul.f32 %v115, %v129
  %v137 = vmul.f32 %v114, %v133
  %138 = vrot.lane.b32.xlu0 %v33, 1
  %v139 = vpop.permute.xlu0 %138
  %140 = vrot.lane.b32.xlu0 %v34, 1
  %v141 = vpop.permute.xlu0 %140
  %142 = vrot.lane.b32.xlu0 %v35, 1
  %v143 = vpop.permute.xlu0 %142
  %144 = vrot.lane.b32.xlu0 %v36, 1
  %v145 = vpop.permute.xlu0 %144
  %vm146 = vcmp.lt.s32.totalorder %v46, 1
  %v147 = vsel %vm146, %v143, %v145
  %v148 = vsel %vm146, %v141, %v143
  %v149 = vsel %vm146, %v139, %v141
  %v150 = vsel %vm146, %v145, %v139
  %v151 = vlaneseq
  %v152 = vshrl.u32 %v151, 7
  %v153 = vsub.s32 3, %v152
  %v154 = vrot.slane %v29, %v153
  %v155 = vlaneseq
  %v156 = vshrl.u32 %v155, 7
  %v157 = vsub.s32 3, %v156
  %v158 = vrot.slane %v30, %v157
  %v159 = vlaneseq
  %v160 = vshrl.u32 %v159, 7
  %v161 = vsub.s32 3, %v160
  %v162 = vrot.slane %v31, %v161
  %v163 = vlaneseq
  %v164 = vshrl.u32 %v163, 7
  %v165 = vsub.s32 3, %v164
  %v166 = vrot.slane %v32, %v165
  %v167 = vmul.f32 %v150, %v154
  %v168 = vmul.f32 %v149, %v158
  %v169 = vmul.f32 %v148, %v162
  %v170 = vmul.f32 %v147, %v166
  %171 = vrot.lane.b32.xlu0 %v33, 127
  %v172 = vpop.permute.xlu0 %171
  %173 = vrot.lane.b32.xlu0 %v34, 127
  %v174 = vpop.permute.xlu0 %173
  %175 = vrot.lane.b32.xlu0 %v35, 127
  %v176 = vpop.permute.xlu0 %175
  %177 = vrot.lane.b32.xlu0 %v36, 127
  %v178 = vpop.permute.xlu0 %177
  %vm179 = vcmp.lt.s32.totalorder %v46, 127
  %v180 = vsel %vm179, %v176, %v178
  %v181 = vsel %vm179, %v174, %v176
  %v182 = vsel %vm179, %v172, %v174
  %v183 = vsel %vm179, %v178, %v172
  %v184 = vlaneseq
  %v185 = vshrl.u32 %v184, 7
  %v186 = vsub.s32 4, %v185
  %v187 = vrot.slane %v29, %v186
  %v188 = vlaneseq
  %v189 = vshrl.u32 %v188, 7
  %v190 = vsub.s32 4, %v189
  %v191 = vrot.slane %v30, %v190
  %v192 = vlaneseq
  %v193 = vshrl.u32 %v192, 7
  %v194 = vsub.s32 4, %v193
  %v195 = vrot.slane %v31, %v194
  %v196 = vlaneseq
  %v197 = vshrl.u32 %v196, 7
  %v198 = vsub.s32 4, %v197
  %v199 = vrot.slane %v32, %v198
  %v200 = vmul.f32 %v182, %v187
  %v201 = vmul.f32 %v181, %v191
  %v202 = vmul.f32 %v180, %v195
  %v203 = vmul.f32 %v183, %v199
  %204 = vrot.lane.b32.xlu0 %v33, 113
  %v205 = vpop.permute.xlu0 %204
  %206 = vrot.lane.b32.xlu0 %v34, 113
  %v207 = vpop.permute.xlu0 %206
  %208 = vrot.lane.b32.xlu0 %v35, 113
  %v209 = vpop.permute.xlu0 %208
  %210 = vrot.lane.b32.xlu0 %v36, 113
  %v211 = vpop.permute.xlu0 %210
  %vm212 = vcmp.lt.s32.totalorder %v46, 113
  %v213 = vsel %vm212, %v209, %v211
  %v214 = vsel %vm212, %v207, %v209
  %v215 = vsel %vm212, %v205, %v207
  %v216 = vsel %vm212, %v211, %v205
  %v217 = vlaneseq
  %v218 = vshrl.u32 %v217, 7
  %v219 = vsub.s32 5, %v218
  %v220 = vrot.slane %v29, %v219
  %v221 = vlaneseq
  %v222 = vshrl.u32 %v221, 7
  %v223 = vsub.s32 5, %v222
  %v224 = vrot.slane %v30, %v223
  %v225 = vlaneseq
  %v226 = vshrl.u32 %v225, 7
  %v227 = vsub.s32 5, %v226
  %v228 = vrot.slane %v31, %v227
  %v229 = vlaneseq
  %v230 = vshrl.u32 %v229, 7
  %v231 = vsub.s32 5, %v230
  %v232 = vrot.slane %v32, %v231
  %v233 = vmul.f32 %v215, %v220
  %v234 = vmul.f32 %v214, %v224
  %v235 = vmul.f32 %v213, %v228
  %v236 = vmul.f32 %v216, %v232
  %237 = vrot.lane.b32.xlu0 %v33, 112
  %v238 = vpop.permute.xlu0 %237
  %239 = vrot.lane.b32.xlu0 %v34, 112
  %v240 = vpop.permute.xlu0 %239
  %241 = vrot.lane.b32.xlu0 %v35, 112
  %v242 = vpop.permute.xlu0 %241
  %243 = vrot.lane.b32.xlu0 %v36, 112
  %v244 = vpop.permute.xlu0 %243
  %vm245 = vcmp.lt.s32.totalorder %v46, 112
  %v246 = vsel %vm245, %v242, %v244
  %v247 = vsel %vm245, %v240, %v242
  %v248 = vsel %vm245, %v238, %v240
  %v249 = vsel %vm245, %v244, %v238
  %v250 = vlaneseq
  %v251 = vshrl.u32 %v250, 7
  %v252 = vsub.s32 6, %v251
  %v253 = vrot.slane %v29, %v252
  %v254 = vlaneseq
  %v255 = vshrl.u32 %v254, 7
  %v256 = vsub.s32 6, %v255
  %v257 = vrot.slane %v30, %v256
  %v258 = vlaneseq
  %v259 = vshrl.u32 %v258, 7
  %v260 = vsub.s32 6, %v259
  %v261 = vrot.slane %v31, %v260
  %v262 = vlaneseq
  %v263 = vshrl.u32 %v262, 7
  %v264 = vsub.s32 6, %v263
  %v265 = vrot.slane %v32, %v264
  %v266 = vmul.f32 %v248, %v253
  %v267 = vmul.f32 %v247, %v257
  %v268 = vmul.f32 %v246, %v261
  %v269 = vmul.f32 %v249, %v265
  %270 = vrot.lane.b32.xlu0 %v33, 111
  %v271 = vpop.permute.xlu0 %270
  %272 = vrot.lane.b32.xlu0 %v34, 111
  %v273 = vpop.permute.xlu0 %272
  %274 = vrot.lane.b32.xlu0 %v35, 111
  %v275 = vpop.permute.xlu0 %274
  %276 = vrot.lane.b32.xlu0 %v36, 111
  %v277 = vpop.permute.xlu0 %276
  %vm278 = vcmp.lt.s32.totalorder %v46, 111
  %v279 = vsel %vm278, %v275, %v277
  %v280 = vsel %vm278, %v273, %v275
  %v281 = vsel %vm278, %v271, %v273
  %v282 = vsel %vm278, %v277, %v271
  %v283 = vlaneseq
  %v284 = vshrl.u32 %v283, 7
  %v285 = vsub.s32 7, %v284
  %v286 = vrot.slane %v29, %v285
  %v287 = vlaneseq
  %v288 = vshrl.u32 %v287, 7
  %v289 = vsub.s32 7, %v288
  %v290 = vrot.slane %v30, %v289
  %v291 = vlaneseq
  %v292 = vshrl.u32 %v291, 7
  %v293 = vsub.s32 7, %v292
  %v294 = vrot.slane %v31, %v293
  %v295 = vlaneseq
  %v296 = vshrl.u32 %v295, 7
  %v297 = vsub.s32 7, %v296
  %v298 = vrot.slane %v32, %v297
  %v299 = vmul.f32 %v281, %v286
  %v300 = vmul.f32 %v280, %v290
  %v301 = vmul.f32 %v279, %v294
  %v302 = vmul.f32 %v282, %v298
  %v303 = vld [vmem:[%s2] sm:$0xff]
  %v304 = vld [vmem:[%s2 + $0x8] sm:$0xff]
  %v305 = vld [vmem:[%s3] sm:$0xff]
  %v306 = vld [vmem:[%s3 + $0x8] sm:$0xff]
  %308 = vset.pattern.permute.xlu0 0
  %309 = vperm.xlu0 %308, %v305
  %v310 = vpop.permute.xlu0 %309
  %313 = vset.pattern.permute.xlu0 0
  %314 = vperm.xlu0 %313, %v306
  %v315 = vpop.permute.xlu0 %314
  %vm317 = vcmask 588800
  %v319 = vsel %vm317, %v303, 0
  %v322 = vsel %vm317, %v304, 0
  %324 = vmatprep.subr.mxu0 %v69
  %325 = vmatpush1.msra.mxu0 %v68
  %326 = vmatprep.subr.mxu0 %v102
  %327 = vmatpush1.msra.mxu0 %v101
  %328 = vmatprep.subr.mxu0 %v135
  %329 = vmatpush1.msra.mxu0 %v134
  %330 = vmatprep.subr.mxu0 %v168
  %331 = vmatpush1.msra.mxu0 %v167
  %332 = vmatprep.subr.mxu0 %v34
  %333 = vmatpush1.msra.mxu0 %v33
  %334 = vmatprep.subr.mxu0 %v201
  %335 = vmatpush1.msra.mxu0 %v200
  %336 = vmatprep.subr.mxu0 %v234
  %337 = vmatpush1.msra.mxu0 %v233
  %338 = vmatprep.subr.mxu0 %v267
  %339 = vmatpush1.msra.mxu0 %v266
  %340 = vmatprep.subr.mxu0 %v300
  %341 = vmatpush1.msra.mxu0 %v299
  %342 = vmatprep.subr.mxu0 0.0
  %343 = vmatpush1.msra.mxu0 0.0
  %344 = vmatprep.subr.mxu0 0.0
  %345 = vmatpush1.msra.mxu0 0.0
  %346 = vmatprep.subr.mxu0 0.0
  %347 = vmatpush1.msra.mxu0 0.0
  %348 = vmatprep.subr.mxu0 0.0
  %349 = vmatpush1.msra.mxu0 0.0
  %350 = vmatprep.subr.mxu0 0.0
  %351 = vmatpush1.msra.mxu0 0.0
  %352 = vmatprep.subr.mxu0 0.0
  %353 = vmatpush1.msra.mxu0 0.0
  %354 = vmatprep.subr.mxu0 0.0
  %355 = vmatpush1.msra.mxu0 0.0
  %356 = vmatprep.subr.mxu0 0.0
  %357 = vmatpush1.msra.mxu0 0.0
  %358 = vmatprep.subr.mxu0 0.0
  %359 = vmatpush1.msra.mxu0 0.0
  %360 = vmatprep.subr.mxu0 0.0
  %361 = vmatpush1.msra.mxu0 0.0
  %362 = vmatprep.subr.mxu0 0.0
  %363 = vmatpush1.msra.mxu0 0.0
  %364 = vmatprep.subr.mxu0 0.0
  %365 = vmatpush1.msra.mxu0 0.0
  %366 = vmatprep.subr.mxu0 0.0
  %367 = vmatpush1.msra.mxu0 0.0
  %368 = vmatprep.subr.mxu0 0.0
  %369 = vmatpush1.msra.mxu0 0.0
  %370 = vmatprep.subr.mxu0 0.0
  %371 = vmatpush1.msra.mxu0 0.0
  %372 = vmatprep.subr.mxu0 0.0
  %373 = vmatpush1.msra.mxu0 0.0
  %374 = vmatprep.subr.mxu0 0.0
  %375 = vmatpush1.msra.mxu0 0.0
  %376 = vmatprep.subr.mxu0 0.0
  %377 = vmatpush1.msra.mxu0 0.0
  %378 = vmatprep.subr.mxu0 0.0
  %379 = vmatpush1.msra.mxu0 0.0
  %380 = vmatprep.subr.mxu0 0.0
  %381 = vmatpush1.msra.mxu0 0.0
  %382 = vmatprep.subr.mxu0 0.0
  %383 = vmatpush1.msra.mxu0 0.0
  %384 = vmatprep.subr.mxu0 0.0
  %385 = vmatpush1.msra.mxu0 0.0
  %386 = vmatprep.subr.mxu0 0.0
  %387 = vmatpush1.msra.mxu0 0.0
  %388 = vmatprep.mubr.f32.mxu0 0.0
  %389 = vmatmul.mubr.f32.gmra.mrb[0].mxu0 %v319
  %v390 = vpop.f32.mrb[0].mxu0
  %v391 = vadd.f32 %v310, %v390
  %v392 = vpop.f32.mrb[0].mxu0
  %v393 = vadd.f32 %v310, %v392
  %394 = vmatprep.mubr.f32.mxu0 0.0
  %395 = vmatmul.mubr.f32.gmra.mrb[0].mxu0 %v322
  %v396 = vpop.f32.mrb[0].mxu0
  %v397 = vadd.f32 %v315, %v396
  %v398 = vpop.f32.mrb[0].mxu0
  %v399 = vadd.f32 %v315, %v398
  %400 = vdwg.mxu0
  %401 = vmatprep.subr.mxu0 %v71
  %402 = vmatpush1.msra.mxu0 %v70
  %403 = vmatprep.subr.mxu0 %v104
  %404 = vmatpush1.msra.mxu0 %v103
  %405 = vmatprep.subr.mxu0 %v137
  %406 = vmatpush1.msra.mxu0 %v136
  %407 = vmatprep.subr.mxu0 %v170
  %408 = vmatpush1.msra.mxu0 %v169
  %409 = vmatprep.subr.mxu0 %v36
  %410 = vmatpush1.msra.mxu0 %v35
  %411 = vmatprep.subr.mxu0 %v203
  %412 = vmatpush1.msra.mxu0 %v202
  %413 = vmatprep.subr.mxu0 %v236
  %414 = vmatpush1.msra.mxu0 %v235
  %415 = vmatprep.subr.mxu0 %v269
  %416 = vmatpush1.msra.mxu0 %v268
  %417 = vmatprep.subr.mxu0 %v302
  %418 = vmatpush1.msra.mxu0 %v301
  %419 = vmatprep.subr.mxu0 0.0
  %420 = vmatpush1.msra.mxu0 0.0
  %421 = vmatprep.subr.mxu0 0.0
  %422 = vmatpush1.msra.mxu0 0.0
  %423 = vmatprep.subr.mxu0 0.0
  %424 = vmatpush1.msra.mxu0 0.0
  %425 = vmatprep.subr.mxu0 0.0
  %426 = vmatpush1.msra.mxu0 0.0
  %427 = vmatprep.subr.mxu0 0.0
  %428 = vmatpush1.msra.mxu0 0.0
  %429 = vmatprep.subr.mxu0 0.0
  %430 = vmatpush1.msra.mxu0 0.0
  %431 = vmatprep.subr.mxu0 0.0
  %432 = vmatpush1.msra.mxu0 0.0
  %433 = vmatprep.subr.mxu0 0.0
  %434 = vmatpush1.msra.mxu0 0.0
  %435 = vmatprep.subr.mxu0 0.0
  %436 = vmatpush1.msra.mxu0 0.0
  %437 = vmatprep.subr.mxu0 0.0
  %438 = vmatpush1.msra.mxu0 0.0
  %439 = vmatprep.subr.mxu0 0.0
  %440 = vmatpush1.msra.mxu0 0.0
  %441 = vmatprep.subr.mxu0 0.0
  %442 = vmatpush1.msra.mxu0 0.0
  %443 = vmatprep.subr.mxu0 0.0
  %444 = vmatpush1.msra.mxu0 0.0
  %445 = vmatprep.subr.mxu0 0.0
  %446 = vmatpush1.msra.mxu0 0.0
  %447 = vmatprep.subr.mxu0 0.0
  %448 = vmatpush1.msra.mxu0 0.0
  %449 = vmatprep.subr.mxu0 0.0
  %450 = vmatpush1.msra.mxu0 0.0
  %451 = vmatprep.subr.mxu0 0.0
  %452 = vmatpush1.msra.mxu0 0.0
  %453 = vmatprep.subr.mxu0 0.0
  %454 = vmatpush1.msra.mxu0 0.0
  %455 = vmatprep.subr.mxu0 0.0
  %456 = vmatpush1.msra.mxu0 0.0
  %457 = vmatprep.subr.mxu0 0.0
  %458 = vmatpush1.msra.mxu0 0.0
  %459 = vmatprep.subr.mxu0 0.0
  %460 = vmatpush1.msra.mxu0 0.0
  %461 = vmatprep.subr.mxu0 0.0
  %462 = vmatpush1.msra.mxu0 0.0
  %463 = vmatprep.subr.mxu0 0.0
  %464 = vmatpush1.msra.mxu0 0.0
  %465 = vmatprep.mubr.f32.mxu0 0.0
  %466 = vmatmul.mubr.f32.gmra.mrb[0].mxu0 %v319
  %v467 = vpop.f32.mrb[0].mxu0
  %v468 = vadd.f32 %v310, %v467
  %v469 = vpop.f32.mrb[0].mxu0
  %v470 = vadd.f32 %v310, %v469
  %471 = vmatprep.mubr.f32.mxu0 0.0
  %472 = vmatmul.mubr.f32.gmra.mrb[0].mxu0 %v322
  %v473 = vpop.f32.mrb[0].mxu0
  %v474 = vadd.f32 %v315, %v473
  %v475 = vpop.f32.mrb[0].mxu0
  %v476 = vadd.f32 %v315, %v475
  %477 = vdwg.mxu0
  %v478 = vmax.f32 %v391, 0.0
  %v479 = vmax.f32 %v393, 0.0
  %v480 = vmax.f32 %v468, 0.0
  %v481 = vmax.f32 %v470, 0.0
  %v482 = vmax.f32 %v397, 0.0
  %v483 = vmax.f32 %v399, 0.0
  %v484 = vmax.f32 %v474, 0.0
  %v485 = vmax.f32 %v476, 0.0
  %486 = vrot.lane.b32.xlu0 %v478, 17
  %v487 = vpop.permute.xlu0 %486
  %488 = vrot.lane.b32.xlu0 %v482, 17
  %v489 = vpop.permute.xlu0 %488
  %490 = vrot.lane.b32.xlu0 %v479, 17
  %v491 = vpop.permute.xlu0 %490
  %492 = vrot.lane.b32.xlu0 %v483, 17
  %v493 = vpop.permute.xlu0 %492
  %494 = vrot.lane.b32.xlu0 %v480, 17
  %v495 = vpop.permute.xlu0 %494
  %496 = vrot.lane.b32.xlu0 %v484, 17
  %v497 = vpop.permute.xlu0 %496
  %498 = vrot.lane.b32.xlu0 %v481, 17
  %v499 = vpop.permute.xlu0 %498
  %500 = vrot.lane.b32.xlu0 %v485, 17
  %v501 = vpop.permute.xlu0 %500
  %v502 = vsel %vm47, %v495, %v499
  %v503 = vsel %vm47, %v497, %v501
  %v504 = vsel %vm47, %v491, %v495
  %v505 = vsel %vm47, %v493, %v497
  %v506 = vsel %vm47, %v487, %v491
  %v507 = vsel %vm47, %v489, %v493
  %v508 = vsel %vm47, %v499, %v487
  %v509 = vsel %vm47, %v501, %v489
  %v510 = vmul.f32 %v508, %v55
  %v511 = vmul.f32 %v506, %v59
  %v512 = vmul.f32 %v504, %v63
  %v513 = vmul.f32 %v502, %v67
  %v514 = vmul.f32 %v509, %v55
  %v515 = vmul.f32 %v507, %v59
  %v516 = vmul.f32 %v505, %v63
  %v517 = vmul.f32 %v503, %v67
  %518 = vrot.lane.b32.xlu0 %v478, 16
  %v519 = vpop.permute.xlu0 %518
  %520 = vrot.lane.b32.xlu0 %v482, 16
  %v521 = vpop.permute.xlu0 %520
  %522 = vrot.lane.b32.xlu0 %v479, 16
  %v523 = vpop.permute.xlu0 %522
  %524 = vrot.lane.b32.xlu0 %v483, 16
  %v525 = vpop.permute.xlu0 %524
  %526 = vrot.lane.b32.xlu0 %v480, 16
  %v527 = vpop.permute.xlu0 %526
  %528 = vrot.lane.b32.xlu0 %v484, 16
  %v529 = vpop.permute.xlu0 %528
  %530 = vrot.lane.b32.xlu0 %v481, 16
  %v531 = vpop.permute.xlu0 %530
  %532 = vrot.lane.b32.xlu0 %v485, 16
  %v533 = vpop.permute.xlu0 %532
  %v534 = vsel %vm80, %v527, %v531
  %v535 = vsel %vm80, %v529, %v533
  %v536 = vsel %vm80, %v523, %v527
  %v537 = vsel %vm80, %v525, %v529
  %v538 = vsel %vm80, %v519, %v523
  %v539 = vsel %vm80, %v521, %v525
  %v540 = vsel %vm80, %v531, %v519
  %v541 = vsel %vm80, %v533, %v521
  %v542 = vmul.f32 %v540, %v88
  %v543 = vmul.f32 %v538, %v92
  %v544 = vmul.f32 %v536, %v96
  %v545 = vmul.f32 %v534, %v100
  %v546 = vmul.f32 %v541, %v88
  %v547 = vmul.f32 %v539, %v92
  %v548 = vmul.f32 %v537, %v96
  %v549 = vmul.f32 %v535, %v100
  %550 = vrot.lane.b32.xlu0 %v478, 15
  %v551 = vpop.permute.xlu0 %550
  %552 = vrot.lane.b32.xlu0 %v482, 15
  %v553 = vpop.permute.xlu0 %552
  %554 = vrot.lane.b32.xlu0 %v479, 15
  %v555 = vpop.permute.xlu0 %554
  %556 = vrot.lane.b32.xlu0 %v483, 15
  %v557 = vpop.permute.xlu0 %556
  %558 = vrot.lane.b32.xlu0 %v480, 15
  %v559 = vpop.permute.xlu0 %558
  %560 = vrot.lane.b32.xlu0 %v484, 15
  %v561 = vpop.permute.xlu0 %560
  %562 = vrot.lane.b32.xlu0 %v481, 15
  %v563 = vpop.permute.xlu0 %562
  %564 = vrot.lane.b32.xlu0 %v485, 15
  %v565 = vpop.permute.xlu0 %564
  %v566 = vsel %vm113, %v559, %v563
  %v567 = vsel %vm113, %v561, %v565
  %v568 = vsel %vm113, %v555, %v559
  %v569 = vsel %vm113, %v557, %v561
  %v570 = vsel %vm113, %v551, %v555
  %v571 = vsel %vm113, %v553, %v557
  %v572 = vsel %vm113, %v563, %v551
  %v573 = vsel %vm113, %v565, %v553
  %v574 = vmul.f32 %v572, %v121
  %v575 = vmul.f32 %v570, %v125
  %v576 = vmul.f32 %v568, %v129
  %v577 = vmul.f32 %v566, %v133
  %v578 = vmul.f32 %v573, %v121
  %v579 = vmul.f32 %v571, %v125
  %v580 = vmul.f32 %v569, %v129
  %v581 = vmul.f32 %v567, %v133
  %582 = vrot.lane.b32.xlu0 %v478, 1
  %v583 = vpop.permute.xlu0 %582
  %584 = vrot.lane.b32.xlu0 %v482, 1
  %v585 = vpop.permute.xlu0 %584
  %586 = vrot.lane.b32.xlu0 %v479, 1
  %v587 = vpop.permute.xlu0 %586
  %588 = vrot.lane.b32.xlu0 %v483, 1
  %v589 = vpop.permute.xlu0 %588
  %590 = vrot.lane.b32.xlu0 %v480, 1
  %v591 = vpop.permute.xlu0 %590
  %592 = vrot.lane.b32.xlu0 %v484, 1
  %v593 = vpop.permute.xlu0 %592
  %594 = vrot.lane.b32.xlu0 %v481, 1
  %v595 = vpop.permute.xlu0 %594
  %596 = vrot.lane.b32.xlu0 %v485, 1
  %v597 = vpop.permute.xlu0 %596
  %v598 = vsel %vm146, %v591, %v595
  %v599 = vsel %vm146, %v593, %v597
  %v600 = vsel %vm146, %v587, %v591
  %v601 = vsel %vm146, %v589, %v593
  %v602 = vsel %vm146, %v583, %v587
  %v603 = vsel %vm146, %v585, %v589
  %v604 = vsel %vm146, %v595, %v583
  %v605 = vsel %vm146, %v597, %v585
  %v606 = vmul.f32 %v604, %v154
  %v607 = vmul.f32 %v602, %v158
  %v608 = vmul.f32 %v600, %v162
  %v609 = vmul.f32 %v598, %v166
  %v610 = vmul.f32 %v605, %v154
  %v611 = vmul.f32 %v603, %v158
  %v612 = vmul.f32 %v601, %v162
  %v613 = vmul.f32 %v599, %v166
  %614 = vrot.lane.b32.xlu0 %v478, 127
  %v615 = vpop.permute.xlu0 %614
  %616 = vrot.lane.b32.xlu0 %v482, 127
  %v617 = vpop.permute.xlu0 %616
  %618 = vrot.lane.b32.xlu0 %v479, 127
  %v619 = vpop.permute.xlu0 %618
  %620 = vrot.lane.b32.xlu0 %v483, 127
  %v621 = vpop.permute.xlu0 %620
  %622 = vrot.lane.b32.xlu0 %v480, 127
  %v623 = vpop.permute.xlu0 %622
  %624 = vrot.lane.b32.xlu0 %v484, 127
  %v625 = vpop.permute.xlu0 %624
  %626 = vrot.lane.b32.xlu0 %v481, 127
  %v627 = vpop.permute.xlu0 %626
  %628 = vrot.lane.b32.xlu0 %v485, 127
  %v629 = vpop.permute.xlu0 %628
  %v630 = vsel %vm179, %v623, %v627
  %v631 = vsel %vm179, %v625, %v629
  %v632 = vsel %vm179, %v619, %v623
  %v633 = vsel %vm179, %v621, %v625
  %v634 = vsel %vm179, %v615, %v619
  %v635 = vsel %vm179, %v617, %v621
  %v636 = vsel %vm179, %v627, %v615
  %v637 = vsel %vm179, %v629, %v617
  %v638 = vmul.f32 %v634, %v187
  %v639 = vmul.f32 %v632, %v191
  %v640 = vmul.f32 %v630, %v195
  %v641 = vmul.f32 %v636, %v199
  %v642 = vmul.f32 %v635, %v187
  %v643 = vmul.f32 %v633, %v191
  %v644 = vmul.f32 %v631, %v195
  %v645 = vmul.f32 %v637, %v199
  %646 = vrot.lane.b32.xlu0 %v478, 113
  %v647 = vpop.permute.xlu0 %646
  %648 = vrot.lane.b32.xlu0 %v482, 113
  %v649 = vpop.permute.xlu0 %648
  %650 = vrot.lane.b32.xlu0 %v479, 113
  %v651 = vpop.permute.xlu0 %650
  %652 = vrot.lane.b32.xlu0 %v483, 113
  %v653 = vpop.permute.xlu0 %652
  %654 = vrot.lane.b32.xlu0 %v480, 113
  %v655 = vpop.permute.xlu0 %654
  %656 = vrot.lane.b32.xlu0 %v484, 113
  %v657 = vpop.permute.xlu0 %656
  %658 = vrot.lane.b32.xlu0 %v481, 113
  %v659 = vpop.permute.xlu0 %658
  %660 = vrot.lane.b32.xlu0 %v485, 113
  %v661 = vpop.permute.xlu0 %660
  %v662 = vsel %vm212, %v655, %v659
  %v663 = vsel %vm212, %v657, %v661
  %v664 = vsel %vm212, %v651, %v655
  %v665 = vsel %vm212, %v653, %v657
  %v666 = vsel %vm212, %v647, %v651
  %v667 = vsel %vm212, %v649, %v653
  %v668 = vsel %vm212, %v659, %v647
  %v669 = vsel %vm212, %v661, %v649
  %v670 = vmul.f32 %v666, %v220
  %v671 = vmul.f32 %v664, %v224
  %v672 = vmul.f32 %v662, %v228
  %v673 = vmul.f32 %v668, %v232
  %v674 = vmul.f32 %v667, %v220
  %v675 = vmul.f32 %v665, %v224
  %v676 = vmul.f32 %v663, %v228
  %v677 = vmul.f32 %v669, %v232
  %678 = vrot.lane.b32.xlu0 %v478, 112
  %v679 = vpop.permute.xlu0 %678
  %680 = vrot.lane.b32.xlu0 %v482, 112
  %v681 = vpop.permute.xlu0 %680
  %682 = vrot.lane.b32.xlu0 %v479, 112
  %v683 = vpop.permute.xlu0 %682
  %684 = vrot.lane.b32.xlu0 %v483, 112
  %v685 = vpop.permute.xlu0 %684
  %686 = vrot.lane.b32.xlu0 %v480, 112
  %v687 = vpop.permute.xlu0 %686
  %688 = vrot.lane.b32.xlu0 %v484, 112
  %v689 = vpop.permute.xlu0 %688
  %690 = vrot.lane.b32.xlu0 %v481, 112
  %v691 = vpop.permute.xlu0 %690
  %692 = vrot.lane.b32.xlu0 %v485, 112
  %v693 = vpop.permute.xlu0 %692
  %v694 = vsel %vm245, %v687, %v691
  %v695 = vsel %vm245, %v689, %v693
  %v696 = vsel %vm245, %v683, %v687
  %v697 = vsel %vm245, %v685, %v689
  %v698 = vsel %vm245, %v679, %v683
  %v699 = vsel %vm245, %v681, %v685
  %v700 = vsel %vm245, %v691, %v679
  %v701 = vsel %vm245, %v693, %v681
  %v702 = vmul.f32 %v698, %v253
  %v703 = vmul.f32 %v696, %v257
  %v704 = vmul.f32 %v694, %v261
  %v705 = vmul.f32 %v700, %v265
  %v706 = vmul.f32 %v699, %v253
  %v707 = vmul.f32 %v697, %v257
  %v708 = vmul.f32 %v695, %v261
  %v709 = vmul.f32 %v701, %v265
  %710 = vrot.lane.b32.xlu0 %v478, 111
  %v711 = vpop.permute.xlu0 %710
  %712 = vrot.lane.b32.xlu0 %v482, 111
  %v713 = vpop.permute.xlu0 %712
  %714 = vrot.lane.b32.xlu0 %v479, 111
  %v715 = vpop.permute.xlu0 %714
  %716 = vrot.lane.b32.xlu0 %v483, 111
  %v717 = vpop.permute.xlu0 %716
  %718 = vrot.lane.b32.xlu0 %v480, 111
  %v719 = vpop.permute.xlu0 %718
  %720 = vrot.lane.b32.xlu0 %v484, 111
  %v721 = vpop.permute.xlu0 %720
  %722 = vrot.lane.b32.xlu0 %v481, 111
  %v723 = vpop.permute.xlu0 %722
  %724 = vrot.lane.b32.xlu0 %v485, 111
  %v725 = vpop.permute.xlu0 %724
  %v726 = vsel %vm278, %v719, %v723
  %v727 = vsel %vm278, %v721, %v725
  %v728 = vsel %vm278, %v715, %v719
  %v729 = vsel %vm278, %v717, %v721
  %v730 = vsel %vm278, %v711, %v715
  %v731 = vsel %vm278, %v713, %v717
  %v732 = vsel %vm278, %v723, %v711
  %v733 = vsel %vm278, %v725, %v713
  %v734 = vmul.f32 %v730, %v286
  %v735 = vmul.f32 %v728, %v290
  %v736 = vmul.f32 %v726, %v294
  %v737 = vmul.f32 %v732, %v298
  %v738 = vmul.f32 %v731, %v286
  %v739 = vmul.f32 %v729, %v290
  %v740 = vmul.f32 %v727, %v294
  %v741 = vmul.f32 %v733, %v298
  %v742 = vld [vmem:[%s4] sm:$0xff]
  %v743 = vld [vmem:[%s4 + $0x8] sm:$0xff]
  %v744 = vld [vmem:[%s4 + $0x10] sm:$0xff]
  %v745 = vld [vmem:[%s4 + $0x18] sm:$0xff]
  %v746 = vld [vmem:[%s5] sm:$0xff]
  %v747 = vld [vmem:[%s5 + $0x8] sm:$0xff]
  %749 = vset.pattern.permute.xlu0 0
  %750 = vperm.xlu0 %749, %v746
  %v751 = vpop.permute.xlu0 %750
  %754 = vset.pattern.permute.xlu0 0
  %755 = vperm.xlu0 %754, %v747
  %v756 = vpop.permute.xlu0 %755
  %vm758 = vcmask 130048
  %v760 = vsel %vm758, %v743, 0
  %v763 = vsel %vm758, %v745, 0
  %765 = vmatprep.subr.mxu0 %v511
  %766 = vmatpush1.msra.mxu0 %v510
  %767 = vmatprep.subr.mxu0 %v515
  %768 = vmatpush1.msra.mxu0 %v514
  %769 = vmatprep.subr.mxu0 %v543
  %770 = vmatpush1.msra.mxu0 %v542
  %771 = vmatprep.subr.mxu0 %v547
  %772 = vmatpush1.msra.mxu0 %v546
  %773 = vmatprep.subr.mxu0 %v575
  %774 = vmatpush1.msra.mxu0 %v574
  %775 = vmatprep.subr.mxu0 %v579
  %776 = vmatpush1.msra.mxu0 %v578
  %777 = vmatprep.subr.mxu0 %v607
  %778 = vmatpush1.msra.mxu0 %v606
  %779 = vmatprep.subr.mxu0 %v611
  %780 = vmatpush1.msra.mxu0 %v610
  %781 = vmatprep.subr.mxu0 %v479
  %782 = vmatpush1.msra.mxu0 %v478
  %783 = vmatprep.subr.mxu0 %v483
  %784 = vmatpush1.msra.mxu0 %v482
  %785 = vmatprep.subr.mxu0 %v639
  %786 = vmatpush1.msra.mxu0 %v638
  %787 = vmatprep.subr.mxu0 %v643
  %788 = vmatpush1.msra.mxu0 %v642
  %789 = vmatprep.subr.mxu0 %v671
  %790 = vmatpush1.msra.mxu0 %v670
  %791 = vmatprep.subr.mxu0 %v675
  %792 = vmatpush1.msra.mxu0 %v674
  %793 = vmatprep.subr.mxu0 %v703
  %794 = vmatpush1.msra.mxu0 %v702
  %795 = vmatprep.subr.mxu0 %v707
  %796 = vmatpush1.msra.mxu0 %v706
  %797 = vmatprep.subr.mxu0 %v735
  %798 = vmatpush1.msra.mxu0 %v734
  %799 = vmatprep.subr.mxu0 %v739
  %800 = vmatpush1.msra.mxu0 %v738
  %801 = vmatprep.subr.mxu0 0.0
  %802 = vmatpush1.msra.mxu0 0.0
  %803 = vmatprep.subr.mxu0 0.0
  %804 = vmatpush1.msra.mxu0 0.0
  %805 = vmatprep.subr.mxu0 0.0
  %806 = vmatpush1.msra.mxu0 0.0
  %807 = vmatprep.subr.mxu0 0.0
  %808 = vmatpush1.msra.mxu0 0.0
  %809 = vmatprep.subr.mxu0 0.0
  %810 = vmatpush1.msra.mxu0 0.0
  %811 = vmatprep.subr.mxu0 0.0
  %812 = vmatpush1.msra.mxu0 0.0
  %813 = vmatprep.subr.mxu0 0.0
  %814 = vmatpush1.msra.mxu0 0.0
  %815 = vmatprep.subr.mxu0 0.0
  %816 = vmatpush1.msra.mxu0 0.0
  %817 = vmatprep.subr.mxu0 0.0
  %818 = vmatpush1.msra.mxu0 0.0
  %819 = vmatprep.subr.mxu0 0.0
  %820 = vmatpush1.msra.mxu0 0.0
  %821 = vmatprep.subr.mxu0 0.0
  %822 = vmatpush1.msra.mxu0 0.0
  %823 = vmatprep.subr.mxu0 0.0
  %824 = vmatpush1.msra.mxu0 0.0
  %825 = vmatprep.subr.mxu0 0.0
  %826 = vmatpush1.msra.mxu0 0.0
  %827 = vmatprep.subr.mxu0 0.0
  %828 = vmatpush1.msra.mxu0 0.0
  %829 = vmatprep.mubr.f32.mxu0 %v760
  %830 = vmatmul.mubr.f32.gmra.mrb[0].mxu0 %v742
  %v831 = vpop.f32.mrb[0].mxu0
  %v832 = vadd.f32 %v751, %v831
  %v833 = vpop.f32.mrb[0].mxu0
  %v834 = vadd.f32 %v751, %v833
  %835 = vmatprep.mubr.f32.mxu0 %v763
  %836 = vmatmul.mubr.f32.gmra.mrb[0].mxu0 %v744
  %v837 = vpop.f32.mrb[0].mxu0
  %v838 = vadd.f32 %v756, %v837
  %v839 = vpop.f32.mrb[0].mxu0
  %v840 = vadd.f32 %v756, %v839
  %841 = vdwg.mxu0
  %842 = vmatprep.subr.mxu0 %v513
  %843 = vmatpush1.msra.mxu0 %v512
  %844 = vmatprep.subr.mxu0 %v517
  %845 = vmatpush1.msra.mxu0 %v516
  %846 = vmatprep.subr.mxu0 %v545
  %847 = vmatpush1.msra.mxu0 %v544
  %848 = vmatprep.subr.mxu0 %v549
  %849 = vmatpush1.msra.mxu0 %v548
  %850 = vmatprep.subr.mxu0 %v577
  %851 = vmatpush1.msra.mxu0 %v576
  %852 = vmatprep.subr.mxu0 %v581
  %853 = vmatpush1.msra.mxu0 %v580
  %854 = vmatprep.subr.mxu0 %v609
  %855 = vmatpush1.msra.mxu0 %v608
  %856 = vmatprep.subr.mxu0 %v613
  %857 = vmatpush1.msra.mxu0 %v612
  %858 = vmatprep.subr.mxu0 %v481
  %859 = vmatpush1.msra.mxu0 %v480
  %860 = vmatprep.subr.mxu0 %v485
  %861 = vmatpush1.msra.mxu0 %v484
  %862 = vmatprep.subr.mxu0 %v641
  %863 = vmatpush1.msra.mxu0 %v640
  %864 = vmatprep.subr.mxu0 %v645
  %865 = vmatpush1.msra.mxu0 %v644
  %866 = vmatprep.subr.mxu0 %v673
  %867 = vmatpush1.msra.mxu0 %v672
  %868 = vmatprep.subr.mxu0 %v677
  %869 = vmatpush1.msra.mxu0 %v676
  %870 = vmatprep.subr.mxu0 %v705
  %871 = vmatpush1.msra.mxu0 %v704
  %872 = vmatprep.subr.mxu0 %v709
  %873 = vmatpush1.msra.mxu0 %v708
  %874 = vmatprep.subr.mxu0 %v737
  %875 = vmatpush1.msra.mxu0 %v736
  %876 = vmatprep.subr.mxu0 %v741
  %877 = vmatpush1.msra.mxu0 %v740
  %878 = vmatprep.subr.mxu0 0.0
  %879 = vmatpush1.msra.mxu0 0.0
  %880 = vmatprep.subr.mxu0 0.0
  %881 = vmatpush1.msra.mxu0 0.0
  %882 = vmatprep.subr.mxu0 0.0
  %883 = vmatpush1.msra.mxu0 0.0
  %884 = vmatprep.subr.mxu0 0.0
  %885 = vmatpush1.msra.mxu0 0.0
  %886 = vmatprep.subr.mxu0 0.0
  %887 = vmatpush1.msra.mxu0 0.0
  %888 = vmatprep.subr.mxu0 0.0
  %889 = vmatpush1.msra.mxu0 0.0
  %890 = vmatprep.subr.mxu0 0.0
  %891 = vmatpush1.msra.mxu0 0.0
  %892 = vmatprep.subr.mxu0 0.0
  %893 = vmatpush1.msra.mxu0 0.0
  %894 = vmatprep.subr.mxu0 0.0
  %895 = vmatpush1.msra.mxu0 0.0
  %896 = vmatprep.subr.mxu0 0.0
  %897 = vmatpush1.msra.mxu0 0.0
  %898 = vmatprep.subr.mxu0 0.0
  %899 = vmatpush1.msra.mxu0 0.0
  %900 = vmatprep.subr.mxu0 0.0
  %901 = vmatpush1.msra.mxu0 0.0
  %902 = vmatprep.subr.mxu0 0.0
  %903 = vmatpush1.msra.mxu0 0.0
  %904 = vmatprep.subr.mxu0 0.0
  %905 = vmatpush1.msra.mxu0 0.0
  %906 = vmatprep.mubr.f32.mxu0 %v760
  %907 = vmatmul.mubr.f32.gmra.mrb[0].mxu0 %v742
  %v908 = vpop.f32.mrb[0].mxu0
  %v909 = vadd.f32 %v751, %v908
  %v910 = vpop.f32.mrb[0].mxu0
  %v911 = vadd.f32 %v751, %v910
  %912 = vmatprep.mubr.f32.mxu0 %v763
  %913 = vmatmul.mubr.f32.gmra.mrb[0].mxu0 %v744
  %v914 = vpop.f32.mrb[0].mxu0
  %v915 = vadd.f32 %v756, %v914
  %v916 = vpop.f32.mrb[0].mxu0
  %v917 = vadd.f32 %v756, %v916
  %918 = vdwg.mxu0
  %v919 = vmax.f32 %v832, 0.0
  %v920 = vmax.f32 %v834, 0.0
  %v921 = vmax.f32 %v909, 0.0
  %v922 = vmax.f32 %v911, 0.0
  %v923 = vmax.f32 %v838, 0.0
  %v924 = vmax.f32 %v840, 0.0
  %v925 = vmax.f32 %v915, 0.0
  %v926 = vmax.f32 %v917, 0.0
  %927 = vrot.lane.b32.xlu0 %v919, 17
  %v928 = vpop.permute.xlu0 %927
  %929 = vrot.lane.b32.xlu0 %v923, 17
  %v930 = vpop.permute.xlu0 %929
  %931 = vrot.lane.b32.xlu0 %v920, 17
  %v932 = vpop.permute.xlu0 %931
  %933 = vrot.lane.b32.xlu0 %v924, 17
  %v934 = vpop.permute.xlu0 %933
  %935 = vrot.lane.b32.xlu0 %v921, 17
  %v936 = vpop.permute.xlu0 %935
  %937 = vrot.lane.b32.xlu0 %v925, 17
  %v938 = vpop.permute.xlu0 %937
  %939 = vrot.lane.b32.xlu0 %v922, 17
  %v940 = vpop.permute.xlu0 %939
  %941 = vrot.lane.b32.xlu0 %v926, 17
  %v942 = vpop.permute.xlu0 %941
  %v943 = vsel %vm47, %v936, %v940
  %v944 = vsel %vm47, %v938, %v942
  %v945 = vsel %vm47, %v932, %v936
  %v946 = vsel %vm47, %v934, %v938
  %v947 = vsel %vm47, %v928, %v932
  %v948 = vsel %vm47, %v930, %v934
  %v949 = vsel %vm47, %v940, %v928
  %v950 = vsel %vm47, %v942, %v930
  %v951 = vmul.f32 %v949, %v55
  %v952 = vmul.f32 %v947, %v59
  %v953 = vmul.f32 %v945, %v63
  %v954 = vmul.f32 %v943, %v67
  %v955 = vmul.f32 %v950, %v55
  %v956 = vmul.f32 %v948, %v59
  %v957 = vmul.f32 %v946, %v63
  %v958 = vmul.f32 %v944, %v67
  %959 = vrot.lane.b32.xlu0 %v919, 16
  %v960 = vpop.permute.xlu0 %959
  %961 = vrot.lane.b32.xlu0 %v923, 16
  %v962 = vpop.permute.xlu0 %961
  %963 = vrot.lane.b32.xlu0 %v920, 16
  %v964 = vpop.permute.xlu0 %963
  %965 = vrot.lane.b32.xlu0 %v924, 16
  %v966 = vpop.permute.xlu0 %965
  %967 = vrot.lane.b32.xlu0 %v921, 16
  %v968 = vpop.permute.xlu0 %967
  %969 = vrot.lane.b32.xlu0 %v925, 16
  %v970 = vpop.permute.xlu0 %969
  %971 = vrot.lane.b32.xlu0 %v922, 16
  %v972 = vpop.permute.xlu0 %971
  %973 = vrot.lane.b32.xlu0 %v926, 16
  %v974 = vpop.permute.xlu0 %973
  %v975 = vsel %vm80, %v968, %v972
  %v976 = vsel %vm80, %v970, %v974
  %v977 = vsel %vm80, %v964, %v968
  %v978 = vsel %vm80, %v966, %v970
  %v979 = vsel %vm80, %v960, %v964
  %v980 = vsel %vm80, %v962, %v966
  %v981 = vsel %vm80, %v972, %v960
  %v982 = vsel %vm80, %v974, %v962
  %v983 = vmul.f32 %v981, %v88
  %v984 = vmul.f32 %v979, %v92
  %v985 = vmul.f32 %v977, %v96
  %v986 = vmul.f32 %v975, %v100
  %v987 = vmul.f32 %v982, %v88
  %v988 = vmul.f32 %v980, %v92
  %v989 = vmul.f32 %v978, %v96
  %v990 = vmul.f32 %v976, %v100
  %991 = vrot.lane.b32.xlu0 %v919, 15
  %v992 = vpop.permute.xlu0 %991
  %993 = vrot.lane.b32.xlu0 %v923, 15
  %v994 = vpop.permute.xlu0 %993
  %995 = vrot.lane.b32.xlu0 %v920, 15
  %v996 = vpop.permute.xlu0 %995
  %997 = vrot.lane.b32.xlu0 %v924, 15
  %v998 = vpop.permute.xlu0 %997
  %999 = vrot.lane.b32.xlu0 %v921, 15
  %v1000 = vpop.permute.xlu0 %999
  %1001 = vrot.lane.b32.xlu0 %v925, 15
  %v1002 = vpop.permute.xlu0 %1001
  %1003 = vrot.lane.b32.xlu0 %v922, 15
  %v1004 = vpop.permute.xlu0 %1003
  %1005 = vrot.lane.b32.xlu0 %v926, 15
  %v1006 = vpop.permute.xlu0 %1005
  %v1007 = vsel %vm113, %v1000, %v1004
  %v1008 = vsel %vm113, %v1002, %v1006
  %v1009 = vsel %vm113, %v996, %v1000
  %v1010 = vsel %vm113, %v998, %v1002
  %v1011 = vsel %vm113, %v992, %v996
  %v1012 = vsel %vm113, %v994, %v998
  %v1013 = vsel %vm113, %v1004, %v992
  %v1014 = vsel %vm113, %v1006, %v994
  %v1015 = vmul.f32 %v1013, %v121
  %v1016 = vmul.f32 %v1011, %v125
  %v1017 = vmul.f32 %v1009, %v129
  %v1018 = vmul.f32 %v1007, %v133
  %v1019 = vmul.f32 %v1014, %v121
  %v1020 = vmul.f32 %v1012, %v125
  %v1021 = vmul.f32 %v1010, %v129
  %v1022 = vmul.f32 %v1008, %v133
  %1023 = vrot.lane.b32.xlu0 %v919, 1
  %v1024 = vpop.permute.xlu0 %1023
  %1025 = vrot.lane.b32.xlu0 %v923, 1
  %v1026 = vpop.permute.xlu0 %1025
  %1027 = vrot.lane.b32.xlu0 %v920, 1
  %v1028 = vpop.permute.xlu0 %1027
  %1029 = vrot.lane.b32.xlu0 %v924, 1
  %v1030 = vpop.permute.xlu0 %1029
  %1031 = vrot.lane.b32.xlu0 %v921, 1
  %v1032 = vpop.permute.xlu0 %1031
  %1033 = vrot.lane.b32.xlu0 %v925, 1
  %v1034 = vpop.permute.xlu0 %1033
  %1035 = vrot.lane.b32.xlu0 %v922, 1
  %v1036 = vpop.permute.xlu0 %1035
  %1037 = vrot.lane.b32.xlu0 %v926, 1
  %v1038 = vpop.permute.xlu0 %1037
  %v1039 = vsel %vm146, %v1032, %v1036
  %v1040 = vsel %vm146, %v1034, %v1038
  %v1041 = vsel %vm146, %v1028, %v1032
  %v1042 = vsel %vm146, %v1030, %v1034
  %v1043 = vsel %vm146, %v1024, %v1028
  %v1044 = vsel %vm146, %v1026, %v1030
  %v1045 = vsel %vm146, %v1036, %v1024
  %v1046 = vsel %vm146, %v1038, %v1026
  %v1047 = vmul.f32 %v1045, %v154
  %v1048 = vmul.f32 %v1043, %v158
  %v1049 = vmul.f32 %v1041, %v162
  %v1050 = vmul.f32 %v1039, %v166
  %v1051 = vmul.f32 %v1046, %v154
  %v1052 = vmul.f32 %v1044, %v158
  %v1053 = vmul.f32 %v1042, %v162
  %v1054 = vmul.f32 %v1040, %v166
  %1055 = vrot.lane.b32.xlu0 %v919, 127
  %v1056 = vpop.permute.xlu0 %1055
  %1057 = vrot.lane.b32.xlu0 %v923, 127
  %v1058 = vpop.permute.xlu0 %1057
  %1059 = vrot.lane.b32.xlu0 %v920, 127
  %v1060 = vpop.permute.xlu0 %1059
  %1061 = vrot.lane.b32.xlu0 %v924, 127
  %v1062 = vpop.permute.xlu0 %1061
  %1063 = vrot.lane.b32.xlu0 %v921, 127
  %v1064 = vpop.permute.xlu0 %1063
  %1065 = vrot.lane.b32.xlu0 %v925, 127
  %v1066 = vpop.permute.xlu0 %1065
  %1067 = vrot.lane.b32.xlu0 %v922, 127
  %v1068 = vpop.permute.xlu0 %1067
  %1069 = vrot.lane.b32.xlu0 %v926, 127
  %v1070 = vpop.permute.xlu0 %1069
  %v1071 = vsel %vm179, %v1064, %v1068
  %v1072 = vsel %vm179, %v1066, %v1070
  %v1073 = vsel %vm179, %v1060, %v1064
  %v1074 = vsel %vm179, %v1062, %v1066
  %v1075 = vsel %vm179, %v1056, %v1060
  %v1076 = vsel %vm179, %v1058, %v1062
  %v1077 = vsel %vm179, %v1068, %v1056
  %v1078 = vsel %vm179, %v1070, %v1058
  %v1079 = vmul.f32 %v1075, %v187
  %v1080 = vmul.f32 %v1073, %v191
  %v1081 = vmul.f32 %v1071, %v195
  %v1082 = vmul.f32 %v1077, %v199
  %v1083 = vmul.f32 %v1076, %v187
  %v1084 = vmul.f32 %v1074, %v191
  %v1085 = vmul.f32 %v1072, %v195
  %v1086 = vmul.f32 %v1078, %v199
  %1087 = vrot.lane.b32.xlu0 %v919, 113
  %v1088 = vpop.permute.xlu0 %1087
  %1089 = vrot.lane.b32.xlu0 %v923, 113
  %v1090 = vpop.permute.xlu0 %1089
  %1091 = vrot.lane.b32.xlu0 %v920, 113
  %v1092 = vpop.permute.xlu0 %1091
  %1093 = vrot.lane.b32.xlu0 %v924, 113
  %v1094 = vpop.permute.xlu0 %1093
  %1095 = vrot.lane.b32.xlu0 %v921, 113
  %v1096 = vpop.permute.xlu0 %1095
  %1097 = vrot.lane.b32.xlu0 %v925, 113
  %v1098 = vpop.permute.xlu0 %1097
  %1099 = vrot.lane.b32.xlu0 %v922, 113
  %v1100 = vpop.permute.xlu0 %1099
  %1101 = vrot.lane.b32.xlu0 %v926, 113
  %v1102 = vpop.permute.xlu0 %1101
  %v1103 = vsel %vm212, %v1096, %v1100
  %v1104 = vsel %vm212, %v1098, %v1102
  %v1105 = vsel %vm212, %v1092, %v1096
  %v1106 = vsel %vm212, %v1094, %v1098
  %v1107 = vsel %vm212, %v1088, %v1092
  %v1108 = vsel %vm212, %v1090, %v1094
  %v1109 = vsel %vm212, %v1100, %v1088
  %v1110 = vsel %vm212, %v1102, %v1090
  %v1111 = vmul.f32 %v1107, %v220
  %v1112 = vmul.f32 %v1105, %v224
  %v1113 = vmul.f32 %v1103, %v228
  %v1114 = vmul.f32 %v1109, %v232
  %v1115 = vmul.f32 %v1108, %v220
  %v1116 = vmul.f32 %v1106, %v224
  %v1117 = vmul.f32 %v1104, %v228
  %v1118 = vmul.f32 %v1110, %v232
  %1119 = vrot.lane.b32.xlu0 %v919, 112
  %v1120 = vpop.permute.xlu0 %1119
  %1121 = vrot.lane.b32.xlu0 %v923, 112
  %v1122 = vpop.permute.xlu0 %1121
  %1123 = vrot.lane.b32.xlu0 %v920, 112
  %v1124 = vpop.permute.xlu0 %1123
  %1125 = vrot.lane.b32.xlu0 %v924, 112
  %v1126 = vpop.permute.xlu0 %1125
  %1127 = vrot.lane.b32.xlu0 %v921, 112
  %v1128 = vpop.permute.xlu0 %1127
  %1129 = vrot.lane.b32.xlu0 %v925, 112
  %v1130 = vpop.permute.xlu0 %1129
  %1131 = vrot.lane.b32.xlu0 %v922, 112
  %v1132 = vpop.permute.xlu0 %1131
  %1133 = vrot.lane.b32.xlu0 %v926, 112
  %v1134 = vpop.permute.xlu0 %1133
  %v1135 = vsel %vm245, %v1128, %v1132
  %v1136 = vsel %vm245, %v1130, %v1134
  %v1137 = vsel %vm245, %v1124, %v1128
  %v1138 = vsel %vm245, %v1126, %v1130
  %v1139 = vsel %vm245, %v1120, %v1124
  %v1140 = vsel %vm245, %v1122, %v1126
  %v1141 = vsel %vm245, %v1132, %v1120
  %v1142 = vsel %vm245, %v1134, %v1122
  %v1143 = vmul.f32 %v1139, %v253
  %v1144 = vmul.f32 %v1137, %v257
  %v1145 = vmul.f32 %v1135, %v261
  %v1146 = vmul.f32 %v1141, %v265
  %v1147 = vmul.f32 %v1140, %v253
  %v1148 = vmul.f32 %v1138, %v257
  %v1149 = vmul.f32 %v1136, %v261
  %v1150 = vmul.f32 %v1142, %v265
  %1151 = vrot.lane.b32.xlu0 %v919, 111
  %v1152 = vpop.permute.xlu0 %1151
  %1153 = vrot.lane.b32.xlu0 %v923, 111
  %v1154 = vpop.permute.xlu0 %1153
  %1155 = vrot.lane.b32.xlu0 %v920, 111
  %v1156 = vpop.permute.xlu0 %1155
  %1157 = vrot.lane.b32.xlu0 %v924, 111
  %v1158 = vpop.permute.xlu0 %1157
  %1159 = vrot.lane.b32.xlu0 %v921, 111
  %v1160 = vpop.permute.xlu0 %1159
  %1161 = vrot.lane.b32.xlu0 %v925, 111
  %v1162 = vpop.permute.xlu0 %1161
  %1163 = vrot.lane.b32.xlu0 %v922, 111
  %v1164 = vpop.permute.xlu0 %1163
  %1165 = vrot.lane.b32.xlu0 %v926, 111
  %v1166 = vpop.permute.xlu0 %1165
  %v1167 = vsel %vm278, %v1160, %v1164
  %v1168 = vsel %vm278, %v1162, %v1166
  %v1169 = vsel %vm278, %v1156, %v1160
  %v1170 = vsel %vm278, %v1158, %v1162
  %v1171 = vsel %vm278, %v1152, %v1156
  %v1172 = vsel %vm278, %v1154, %v1158
  %v1173 = vsel %vm278, %v1164, %v1152
  %v1174 = vsel %vm278, %v1166, %v1154
  %v1175 = vmul.f32 %v1171, %v286
  %v1176 = vmul.f32 %v1169, %v290
  %v1177 = vmul.f32 %v1167, %v294
  %v1178 = vmul.f32 %v1173, %v298
  %v1179 = vmul.f32 %v1172, %v286
  %v1180 = vmul.f32 %v1170, %v290
  %v1181 = vmul.f32 %v1168, %v294
  %v1182 = vmul.f32 %v1174, %v298
  %v1183 = vld [vmem:[%s6] sm:$0xff]
  %v1184 = vld [vmem:[%s6 + $0x8] sm:$0xff]
  %v1185 = vld [vmem:[%s7] sm:$0xff]
  %1187 = vset.pattern.permute.xlu0 0
  %1188 = vperm.xlu0 %1187, %v1185
  %v1189 = vpop.permute.xlu0 %1188
  %v1192 = vsel %vm758, %v1184, 0
  %1194 = vmatprep.subr.mxu0 %v952
  %1195 = vmatpush1.msra.mxu0 %v951
  %1196 = vmatprep.subr.mxu0 %v956
  %1197 = vmatpush1.msra.mxu0 %v955
  %1198 = vmatprep.subr.mxu0 %v984
  %1199 = vmatpush1.msra.mxu0 %v983
  %1200 = vmatprep.subr.mxu0 %v988
  %1201 = vmatpush1.msra.mxu0 %v987
  %1202 = vmatprep.subr.mxu0 %v1016
  %1203 = vmatpush1.msra.mxu0 %v1015
  %1204 = vmatprep.subr.mxu0 %v1020
  %1205 = vmatpush1.msra.mxu0 %v1019
  %1206 = vmatprep.subr.mxu0 %v1048
  %1207 = vmatpush1.msra.mxu0 %v1047
  %1208 = vmatprep.subr.mxu0 %v1052
  %1209 = vmatpush1.msra.mxu0 %v1051
  %1210 = vmatprep.subr.mxu0 %v920
  %1211 = vmatpush1.msra.mxu0 %v919
  %1212 = vmatprep.subr.mxu0 %v924
  %1213 = vmatpush1.msra.mxu0 %v923
  %1214 = vmatprep.subr.mxu0 %v1080
  %1215 = vmatpush1.msra.mxu0 %v1079
  %1216 = vmatprep.subr.mxu0 %v1084
  %1217 = vmatpush1.msra.mxu0 %v1083
  %1218 = vmatprep.subr.mxu0 %v1112
  %1219 = vmatpush1.msra.mxu0 %v1111
  %1220 = vmatprep.subr.mxu0 %v1116
  %1221 = vmatpush1.msra.mxu0 %v1115
  %1222 = vmatprep.subr.mxu0 %v1144
  %1223 = vmatpush1.msra.mxu0 %v1143
  %1224 = vmatprep.subr.mxu0 %v1148
  %1225 = vmatpush1.msra.mxu0 %v1147
  %1226 = vmatprep.subr.mxu0 %v1176
  %1227 = vmatpush1.msra.mxu0 %v1175
  %1228 = vmatprep.subr.mxu0 %v1180
  %1229 = vmatpush1.msra.mxu0 %v1179
  %1230 = vmatprep.subr.mxu0 0.0
  %1231 = vmatpush1.msra.mxu0 0.0
  %1232 = vmatprep.subr.mxu0 0.0
  %1233 = vmatpush1.msra.mxu0 0.0
  %1234 = vmatprep.subr.mxu0 0.0
  %1235 = vmatpush1.msra.mxu0 0.0
  %1236 = vmatprep.subr.mxu0 0.0
  %1237 = vmatpush1.msra.mxu0 0.0
  %1238 = vmatprep.subr.mxu0 0.0
  %1239 = vmatpush1.msra.mxu0 0.0
  %1240 = vmatprep.subr.mxu0 0.0
  %1241 = vmatpush1.msra.mxu0 0.0
  %1242 = vmatprep.subr.mxu0 0.0
  %1243 = vmatpush1.msra.mxu0 0.0
  %1244 = vmatprep.subr.mxu0 0.0
  %1245 = vmatpush1.msra.mxu0 0.0
  %1246 = vmatprep.subr.mxu0 0.0
  %1247 = vmatpush1.msra.mxu0 0.0
  %1248 = vmatprep.subr.mxu0 0.0
  %1249 = vmatpush1.msra.mxu0 0.0
  %1250 = vmatprep.subr.mxu0 0.0
  %1251 = vmatpush1.msra.mxu0 0.0
  %1252 = vmatprep.subr.mxu0 0.0
  %1253 = vmatpush1.msra.mxu0 0.0
  %1254 = vmatprep.subr.mxu0 0.0
  %1255 = vmatpush1.msra.mxu0 0.0
  %1256 = vmatprep.subr.mxu0 0.0
  %1257 = vmatpush1.msra.mxu0 0.0
  %1258 = vmatprep.mubr.f32.mxu0 %v1192
  %1259 = vmatmul.mubr.f32.gmra.mrb[0].mxu0 %v1183
  %v1260 = vpop.f32.mrb[0].mxu0
  %v1261 = vadd.f32 %v1189, %v1260
  %v1262 = vpop.f32.mrb[0].mxu0
  %v1263 = vadd.f32 %v1189, %v1262
  %1264 = vdwg.mxu0
  %1265 = vmatprep.subr.mxu0 %v954
  %1266 = vmatpush1.msra.mxu0 %v953
  %1267 = vmatprep.subr.mxu0 %v958
  %1268 = vmatpush1.msra.mxu0 %v957
  %1269 = vmatprep.subr.mxu0 %v986
  %1270 = vmatpush1.msra.mxu0 %v985
  %1271 = vmatprep.subr.mxu0 %v990
  %1272 = vmatpush1.msra.mxu0 %v989
  %1273 = vmatprep.subr.mxu0 %v1018
  %1274 = vmatpush1.msra.mxu0 %v1017
  %1275 = vmatprep.subr.mxu0 %v1022
  %1276 = vmatpush1.msra.mxu0 %v1021
  %1277 = vmatprep.subr.mxu0 %v1050
  %1278 = vmatpush1.msra.mxu0 %v1049
  %1279 = vmatprep.subr.mxu0 %v1054
  %1280 = vmatpush1.msra.mxu0 %v1053
  %1281 = vmatprep.subr.mxu0 %v922
  %1282 = vmatpush1.msra.mxu0 %v921
  %1283 = vmatprep.subr.mxu0 %v926
  %1284 = vmatpush1.msra.mxu0 %v925
  %1285 = vmatprep.subr.mxu0 %v1082
  %1286 = vmatpush1.msra.mxu0 %v1081
  %1287 = vmatprep.subr.mxu0 %v1086
  %1288 = vmatpush1.msra.mxu0 %v1085
  %1289 = vmatprep.subr.mxu0 %v1114
  %1290 = vmatpush1.msra.mxu0 %v1113
  %1291 = vmatprep.subr.mxu0 %v1118
  %1292 = vmatpush1.msra.mxu0 %v1117
  %1293 = vmatprep.subr.mxu0 %v1146
  %1294 = vmatpush1.msra.mxu0 %v1145
  %1295 = vmatprep.subr.mxu0 %v1150
  %1296 = vmatpush1.msra.mxu0 %v1149
  %1297 = vmatprep.subr.mxu0 %v1178
  %1298 = vmatpush1.msra.mxu0 %v1177
  %1299 = vmatprep.subr.mxu0 %v1182
  %1300 = vmatpush1.msra.mxu0 %v1181
  %1301 = vmatprep.subr.mxu0 0.0
  %1302 = vmatpush1.msra.mxu0 0.0
  %1303 = vmatprep.subr.mxu0 0.0
  %1304 = vmatpush1.msra.mxu0 0.0
  %1305 = vmatprep.subr.mxu0 0.0
  %1306 = vmatpush1.msra.mxu0 0.0
  %1307 = vmatprep.subr.mxu0 0.0
  %1308 = vmatpush1.msra.mxu0 0.0
  %1309 = vmatprep.subr.mxu0 0.0
  %1310 = vmatpush1.msra.mxu0 0.0
  %1311 = vmatprep.subr.mxu0 0.0
  %1312 = vmatpush1.msra.mxu0 0.0
  %1313 = vmatprep.subr.mxu0 0.0
  %1314 = vmatpush1.msra.mxu0 0.0
  %1315 = vmatprep.subr.mxu0 0.0
  %1316 = vmatpush1.msra.mxu0 0.0
  %1317 = vmatprep.subr.mxu0 0.0
  %1318 = vmatpush1.msra.mxu0 0.0
  %1319 = vmatprep.subr.mxu0 0.0
  %1320 = vmatpush1.msra.mxu0 0.0
  %1321 = vmatprep.subr.mxu0 0.0
  %1322 = vmatpush1.msra.mxu0 0.0
  %1323 = vmatprep.subr.mxu0 0.0
  %1324 = vmatpush1.msra.mxu0 0.0
  %1325 = vmatprep.subr.mxu0 0.0
  %1326 = vmatpush1.msra.mxu0 0.0
  %1327 = vmatprep.subr.mxu0 0.0
  %1328 = vmatpush1.msra.mxu0 0.0
  %1329 = vmatprep.mubr.f32.mxu0 %v1192
  %1330 = vmatmul.mubr.f32.gmra.mrb[0].mxu0 %v1183
  %v1331 = vpop.f32.mrb[0].mxu0
  %v1332 = vadd.f32 %v1189, %v1331
  %v1333 = vpop.f32.mrb[0].mxu0
  %v1334 = vadd.f32 %v1189, %v1333
  %1335 = vdwg.mxu0
  %v1336 = vmax.f32 %v1261, 0.0
  %v1337 = vmax.f32 %v1263, 0.0
  %v1338 = vmax.f32 %v1332, 0.0
  %v1339 = vmax.f32 %v1334, 0.0
  %1340 = vst [vmem:[%s8] sm:$0xff] %v1336
  %1341 = vst [vmem:[%s8 + $0x8] sm:$0xff] %v1337
  %1342 = vst [vmem:[%s8 + $0x10] sm:$0xff] %v1338
  %1343 = vst [vmem:[%s8 + $0x18] sm:$0xff] %v1339
  // Predicated region
  $region34: #{model_forward.1} parent=0 // pred_check
    _
  $region35: #{model_forward.1} parent=0 // pred_check_branch
    %1345 = sbr.rel (0) target = $region37
  $region36: #{model_forward.1} parent=0 // pred_region
    _
  $region37: #{model_forward.1} parent=0 // pred_fallthru
    _
  // Predicated region
  $region38: #{model_forward.1} parent=0 // pred_check
    _
  $region39: #{model_forward.1} parent=0 // pred_check_branch
    %1347 = sbr.rel (0) target = $region41
  $region40: #{model_forward.1} parent=0 // pred_region
    _
  $region41: #{model_forward.1} parent=0 // pred_fallthru
    _

</llo_original>
